<compile_context>
chip_gen: v6e
topology: v6e:2x2x1
jax: 0.10.0
libtpu: 0.0.40
codegen_flags: <defaults>
</compile_context>

<pallas_src>
import math

import jax
import jax.numpy as jnp
from jax import lax
from jax.experimental import pallas as pl
from jax.experimental.pallas import tpu as pltpu

# ---------------- model hyperparameters (small, consistent with the module) ---
NUM_HEADS = 4
D_MODEL   = 32
HEAD_DIM  = D_MODEL // NUM_HEADS          # 8
HALF      = HEAD_DIM // 2                 # 4
BATCH     = 2
SEQ       = 8
SCALE     = 1.0 / math.sqrt(HEAD_DIM)
ROPE_BASE = 10000.0

# Static invariants the RoPE-via-lane-roll trick and the slab packing rely on.
assert D_MODEL == NUM_HEADS * HEAD_DIM, "d_model must equal num_heads * head_dim"
assert HEAD_DIM == 2 * HALF and HEAD_DIM % 2 == 0, "head_dim must be even (rotate-half RoPE)"
assert 4 * D_MODEL == 128, "activation/table slab expected to be exactly 128 lanes wide"
assert 3 * D_MODEL + D_MODEL == 128, "weight slab expected to be exactly 128 lanes wide"


# ------------------------------- Pallas kernel --------------------------------
def attention_block_kernel(slab_ref, w_ref, o_ref, attn_ref):
    # slab_ref: (B*S, 4D) = [ x | cos | sin1 | sin2 ]  (lane-dense, one DMA)
    # w_ref:    (D, 4D)   = [ Wq*scale | Wk | Wv | Wout ] (head-major within Q/K/V)
    # o_ref:    (B*S, D)
    # attn_ref: (B*S, D)  VMEM scratch for the concatenated per-head outputs
    x    = slab_ref[:, 0 * D_MODEL:1 * D_MODEL]
    cos  = slab_ref[:, 1 * D_MODEL:2 * D_MODEL]
    sin1 = slab_ref[:, 2 * D_MODEL:3 * D_MODEL]
    sin2 = slab_ref[:, 3 * D_MODEL:4 * D_MODEL]

    # in_proj for the whole (batch*seq) slab: one (B*S, D) x (D, 3D) MXU matmul.
    # The 1/sqrt(head_dim) scale is already folded into the Q weight columns.
    qkv = jnp.dot(x, w_ref[:, :3 * D_MODEL], preferred_element_type=jnp.float32)
    q = qkv[:, :D_MODEL]
    k = qkv[:, D_MODEL:2 * D_MODEL]
    v = qkv[:, 2 * D_MODEL:]

    # Rotate-half RoPE on the full-width (B*S, D) slabs.  The "partner" lane
    # (t[j+HALF] for a head's first half, t[j-HALF] for its second half) is
    # fetched with two lane rotations (XLU slot); the sign / zero structure is
    # baked into the precomputed sin tables, so no per-head slicing is needed.
    # Wraparound across head / array boundaries is masked by the zeroed lanes.
    def rope(t):
        t_fwd = pltpu.roll(t, shift=D_MODEL - HALF, axis=1)   # t[(c + HALF) mod D]
        t_bwd = pltpu.roll(t, shift=HALF, axis=1)             # t[(c - HALF) mod D]
        return t * cos + t_fwd * sin1 + t_bwd * sin2

    q = rope(q)
    k = rope(k)

    # Full (unmasked) attention, matching flex_attention(block_mask=None).
    # Fully-unrolled static (batch, head) loop over 2-D lane/sublane slices:
    # no reshape / transpose relayouts, results written straight into the
    # attn scratch at the head's lane offset.
    for b in range(BATCH):
        r = b * SEQ
        for h in range(NUM_HEADS):
            c = h * HEAD_DIM
            qh = q[r:r + SEQ, c:c + HEAD_DIM]                 # (S, hd)
            kh = k[r:r + SEQ, c:c + HEAD_DIM]
            vh = v[r:r + SEQ, c:c + HEAD_DIM]
            # q @ k^T via dot_general contracting the last axes (no transpose).
            s = lax.dot_general(qh, kh, (((1,), (1,)), ((), ())),
                                preferred_element_type=jnp.float32)   # (S, S)
            m = jnp.max(s, axis=-1, keepdims=True)
            p = jnp.exp(s - m)
            l = jnp.sum(p, axis=-1, keepdims=True)
            o = jnp.dot(p, vh, preferred_element_type=jnp.float32)    # (S, hd)
            attn_ref[r:r + SEQ, c:c + HEAD_DIM] = o / l               # exact norm

    # out_proj: single (B*S, D) x (D, D) MXU matmul, single store.
    o_ref[...] = jnp.dot(attn_ref[...], w_ref[:, 3 * D_MODEL:],
                         preferred_element_type=jnp.float32).astype(o_ref.dtype)


# --------------------------- one-time wrapper prep ------------------------------
def prepare_weights(w_in_t, w_out_t):
    """Build the (D, 4D) weight slab once (outside the per-call path).

    Permutes in_proj columns from PyTorch's per-head [q|k|v] interleave to wide
    contiguous [Q(all heads) | K(all heads) | V(all heads)] slabs, folds the
    attention scale into the Q columns (RoPE is linear, so scaling q before the
    rotation is equivalent), and concatenates out_proj -> one lane-dense slab.
    """
    new_cols = jnp.arange(3 * D_MODEL)
    part = new_cols // D_MODEL
    rem  = new_cols % D_MODEL
    head = rem // HEAD_DIM
    j    = rem % HEAD_DIM
    old_cols = head * (3 * HEAD_DIM) + part * HEAD_DIM + j
    w_in_p = w_in_t[:, old_cols]
    w_in_p = w_in_p.at[:, :D_MODEL].multiply(SCALE)        # fold scale into Q
    return jnp.concatenate([w_in_p, w_out_t], axis=1)      # (D, 4D) = (32, 128)


def prepare_rope_tables(positions):
    """Full-width (B*S, D) RoPE tables (once, outside the per-call path)."""
    B, S = positions.shape
    inv_freq = 1.0 / (ROPE_BASE ** (jnp.arange(HALF, dtype=jnp.float32) * 2.0 / HEAD_DIM))
    ang = positions.astype(jnp.float32)[..., None] * inv_freq[None, None, :]   # (B,S,HALF)
    cos_h, sin_h = jnp.cos(ang), jnp.sin(ang)
    zeros = jnp.zeros_like(sin_h)
    cos_head  = jnp.concatenate([cos_h, cos_h], axis=-1)      # per-head [c0..,c0..]
    sin1_head = jnp.concatenate([-sin_h, zeros], axis=-1)     # acts on first half
    sin2_head = jnp.concatenate([zeros, sin_h], axis=-1)      # acts on second half
    tile = lambda t: jnp.tile(t, (1, 1, NUM_HEADS)).reshape(B * S, D_MODEL)
    return tile(cos_head), tile(sin1_head), tile(sin2_head)


# ------------------------------- per-call wrapper -------------------------------
@jax.jit
def attention_block_forward(x, w_all, cos_t, sin1_t, sin2_t):
    """x: (B, S, D) f32; w_all: (D, 4D); cos/sin tables: (B*S, D)."""
    B, S, D = x.shape
    x2d = x.reshape(B * S, D)                               # fold batch into matmul M dim
    # Pack activations + tables into one lane-dense (B*S, 128) slab -> single DMA.
    slab = jnp.concatenate([x2d, cos_t, sin1_t, sin2_t], axis=1)

    vmem = pl.BlockSpec(memory_space=pltpu.MemorySpace.VMEM)
    out2d = pl.pallas_call(
        attention_block_kernel,
        out_shape=jax.ShapeDtypeStruct((B * S, D), x.dtype),
        in_specs=[vmem, vmem],
        out_specs=vmem,
        scratch_shapes=[pltpu.VMEM((B * S, D), jnp.float32)],
    )(slab, w_all)
    return out2d.reshape(B, S, D)


# ------------------------------- pure-JAX reference ----------------------------
def reference_forward(x, w_in_t, w_out_t, positions):
    B, S, D = x.shape
    inv_freq = 1.0 / (ROPE_BASE ** (jnp.arange(HALF, dtype=jnp.float32) * 2.0 / HEAD_DIM))
    angles = positions.astype(jnp.float32)[..., None] * inv_freq[None, None, :]
    cos, sin = jnp.cos(angles), jnp.sin(angles)

    qkv = x @ w_in_t                                   # (B, S, 3D)
    qkv = qkv.reshape(B, S, NUM_HEADS, 3 * HEAD_DIM)
    q, k, v = jnp.split(qkv, 3, axis=-1)               # each (B, S, H, hd)

    def rope(t):
        t1, t2 = t[..., :HALF], t[..., HALF:]
        c, s_ = cos[:, :, None, :], sin[:, :, None, :]
        return jnp.concatenate([t1 * c - t2 * s_, t2 * c + t1 * s_], axis=-1)

    q, k = rope(q), rope(k)
    q = jnp.transpose(q, (0, 2, 1, 3))                 # (B, H, S, hd)
    k = jnp.transpose(k, (0, 2, 1, 3))
    v = jnp.transpose(v, (0, 2, 1, 3))
    s = jnp.einsum("bhqd,bhkd->bhqk", q, k) * SCALE
    p = jax.nn.softmax(s, axis=-1)
    o = jnp.einsum("bhqk,bhkd->bhqd", p, v)            # (B, H, S, hd)
    o = jnp.transpose(o, (0, 2, 1, 3)).reshape(B, S, D)
    return o @ w_out_t


# ------------------------------- main -------------------------------------------
if __name__ == "__main__":
    key = jax.random.PRNGKey(0)
    k_x, k_win, k_wout = jax.random.split(key, 3)

    x = jax.random.normal(k_x, (BATCH, SEQ, D_MODEL), dtype=jnp.float32)
    # nn.Linear(d_model, 3*d_model, bias=False): weight (3D, D); stored transposed (D, 3D)
    w_in_t  = jax.random.normal(k_win,  (D_MODEL, 3 * D_MODEL), dtype=jnp.float32) * 0.05
    # nn.Linear(d_model, d_model, bias=False): stored transposed (D, D)
    w_out_t = jax.random.normal(k_wout, (D_MODEL, D_MODEL), dtype=jnp.float32) * 0.05
    positions = jnp.broadcast_to(jnp.arange(SEQ, dtype=jnp.int32)[None, :], (BATCH, SEQ))

    # One-time prep (hoisted out of the per-call path).
    w_all = prepare_weights(w_in_t, w_out_t)
    cos_t, sin1_t, sin2_t = prepare_rope_tables(positions)
    w_all, cos_t, sin1_t, sin2_t = jax.block_until_ready((w_all, cos_t, sin1_t, sin2_t))

    out = attention_block_forward(x, w_all, cos_t, sin1_t, sin2_t)
    out = jax.block_until_ready(out)

    ref = reference_forward(x, w_in_t, w_out_t, positions)
    assert out.shape == (BATCH, SEQ, D_MODEL)
    assert jnp.allclose(out, ref, atol=1e-4, rtol=1e-4), "mismatch vs JAX reference"

    print("KERNEL_OK")
</pallas_src>

<mosaic_0001>
module attributes {stable_mosaic.version = 11 : i64} {
  func.func @attention_block_kernel(%arg0: memref<16x128xf32, #tpu.memory_space<vmem>>, %arg1: memref<32x128xf32, #tpu.memory_space<vmem>>, %arg2: memref<16x32xf32, #tpu.memory_space<vmem>>, %arg3: memref<16x32xf32, #tpu.memory_space<vmem>>) attributes {dimension_semantics = [], scalar_prefetch = 0 : i64, scratch_operands = 1 : i64, tpu.core_type = #tpu.core_type<tc>} {
    %c0 = arith.constant 0 : index
    %c0_0 = arith.constant 0 : index
    %0 = vector.load %arg0[%c0, %c0_0] : memref<16x128xf32, #tpu.memory_space<vmem>>, vector<16x32xf32>
    %c0_1 = arith.constant 0 : index
    %c32 = arith.constant 32 : index
    %1 = vector.load %arg0[%c0_1, %c32] : memref<16x128xf32, #tpu.memory_space<vmem>>, vector<16x32xf32>
    %c0_2 = arith.constant 0 : index
    %c64 = arith.constant 64 : index
    %2 = vector.load %arg0[%c0_2, %c64] : memref<16x128xf32, #tpu.memory_space<vmem>>, vector<16x32xf32>
    %c0_3 = arith.constant 0 : index
    %c96 = arith.constant 96 : index
    %3 = vector.load %arg0[%c0_3, %c96] : memref<16x128xf32, #tpu.memory_space<vmem>>, vector<16x32xf32>
    %c0_4 = arith.constant 0 : index
    %c0_5 = arith.constant 0 : index
    %4 = vector.load %arg1[%c0_4, %c0_5] : memref<32x128xf32, #tpu.memory_space<vmem>>, vector<32x96xf32>
    %cst = arith.constant dense<0.000000e+00> : vector<16x96xf32>
    %5 = tpu.matmul %0, %4, %cst {dimension_numbers = #tpu.dot_dimension_numbers<[1], [0], [0], [1], [0, 0, 1, 1], [], []>} : vector<16x32xf32>, vector<32x96xf32>, vector<16x96xf32> -> vector<16x96xf32>
    %6 = vector.extract_strided_slice %5 {offsets = [0, 0], sizes = [16, 32], strides = [1, 1]} : vector<16x96xf32> to vector<16x32xf32>
    %7 = vector.extract_strided_slice %5 {offsets = [0, 32], sizes = [16, 32], strides = [1, 1]} : vector<16x96xf32> to vector<16x32xf32>
    %8 = vector.extract_strided_slice %5 {offsets = [0, 64], sizes = [16, 32], strides = [1, 1]} : vector<16x96xf32> to vector<16x32xf32>
    %c28_i32 = arith.constant 28 : i32
    %9 = tpu.dynamic_rotate %6 by %c28_i32 dim 1 : vector<16x32xf32>, i32 -> vector<16x32xf32>
    %c4_i32 = arith.constant 4 : i32
    %10 = tpu.dynamic_rotate %6 by %c4_i32 dim 1 : vector<16x32xf32>, i32 -> vector<16x32xf32>
    %11 = arith.mulf %6, %1 : vector<16x32xf32>
    %12 = arith.mulf %9, %2 : vector<16x32xf32>
    %13 = arith.addf %11, %12 : vector<16x32xf32>
    %14 = arith.mulf %10, %3 : vector<16x32xf32>
    %15 = arith.addf %13, %14 : vector<16x32xf32>
    %c28_i32_6 = arith.constant 28 : i32
    %16 = tpu.dynamic_rotate %7 by %c28_i32_6 dim 1 : vector<16x32xf32>, i32 -> vector<16x32xf32>
    %c4_i32_7 = arith.constant 4 : i32
    %17 = tpu.dynamic_rotate %7 by %c4_i32_7 dim 1 : vector<16x32xf32>, i32 -> vector<16x32xf32>
    %18 = arith.mulf %7, %1 : vector<16x32xf32>
    %19 = arith.mulf %16, %2 : vector<16x32xf32>
    %20 = arith.addf %18, %19 : vector<16x32xf32>
    %21 = arith.mulf %17, %3 : vector<16x32xf32>
    %22 = arith.addf %20, %21 : vector<16x32xf32>
    %23 = vector.extract_strided_slice %15 {offsets = [0, 0], sizes = [8, 8], strides = [1, 1]} : vector<16x32xf32> to vector<8x8xf32>
    %24 = vector.extract_strided_slice %22 {offsets = [0, 0], sizes = [8, 8], strides = [1, 1]} : vector<16x32xf32> to vector<8x8xf32>
    %25 = vector.extract_strided_slice %8 {offsets = [0, 0], sizes = [8, 8], strides = [1, 1]} : vector<16x32xf32> to vector<8x8xf32>
    %cst_8 = arith.constant dense<0.000000e+00> : vector<8x8xf32>
    %26 = tpu.matmul %23, %24, %cst_8 {dimension_numbers = #tpu.dot_dimension_numbers<[1], [1], [0], [0], [0, 0, 1, 0], [], []>} : vector<8x8xf32>, vector<8x8xf32>, vector<8x8xf32> -> vector<8x8xf32>
    %cst_9 = arith.constant dense<0xFF800000> : vector<8xf32>
    %27 = vector.multi_reduction <maximumf>, %26, %cst_9 [1] : vector<8x8xf32> to vector<8xf32>
    %28 = vector.shape_cast %27 : vector<8xf32> to vector<8x1xf32>
    %29 = vector.broadcast %28 : vector<8x1xf32> to vector<8x8xf32>
    %30 = arith.subf %26, %29 : vector<8x8xf32>
    %31 = math.exp %30 : vector<8x8xf32>
    %cst_10 = arith.constant dense<0.000000e+00> : vector<8xf32>
    %32 = vector.multi_reduction <add>, %31, %cst_10 [1] : vector<8x8xf32> to vector<8xf32>
    %33 = vector.shape_cast %32 : vector<8xf32> to vector<8x1xf32>
    %cst_11 = arith.constant dense<0.000000e+00> : vector<8x8xf32>
    %34 = tpu.matmul %31, %25, %cst_11 {dimension_numbers = #tpu.dot_dimension_numbers<[1], [0], [0], [1], [0, 0, 1, 1], [], []>} : vector<8x8xf32>, vector<8x8xf32>, vector<8x8xf32> -> vector<8x8xf32>
    %35 = vector.broadcast %33 : vector<8x1xf32> to vector<8x8xf32>
    %36 = arith.divf %34, %35 : vector<8x8xf32>
    %c0_12 = arith.constant 0 : index
    %c0_13 = arith.constant 0 : index
    %37 = vector.load %arg3[%c0_12, %c0_13] : memref<16x32xf32, #tpu.memory_space<vmem>>, vector<8x8xf32>
    tpu.vector_store %arg3[%c0_12, %c0_13], %36 {strides = array<i32>} : memref<16x32xf32, #tpu.memory_space<vmem>>, vector<8x8xf32>,
    %38 = vector.extract_strided_slice %15 {offsets = [0, 8], sizes = [8, 8], strides = [1, 1]} : vector<16x32xf32> to vector<8x8xf32>
    %39 = vector.extract_strided_slice %22 {offsets = [0, 8], sizes = [8, 8], strides = [1, 1]} : vector<16x32xf32> to vector<8x8xf32>
    %40 = vector.extract_strided_slice %8 {offsets = [0, 8], sizes = [8, 8], strides = [1, 1]} : vector<16x32xf32> to vector<8x8xf32>
    %cst_14 = arith.constant dense<0.000000e+00> : vector<8x8xf32>
    %41 = tpu.matmul %38, %39, %cst_14 {dimension_numbers = #tpu.dot_dimension_numbers<[1], [1], [0], [0], [0, 0, 1, 0], [], []>} : vector<8x8xf32>, vector<8x8xf32>, vector<8x8xf32> -> vector<8x8xf32>
    %cst_15 = arith.constant dense<0xFF800000> : vector<8xf32>
    %42 = vector.multi_reduction <maximumf>, %41, %cst_15 [1] : vector<8x8xf32> to vector<8xf32>
    %43 = vector.shape_cast %42 : vector<8xf32> to vector<8x1xf32>
    %44 = vector.broadcast %43 : vector<8x1xf32> to vector<8x8xf32>
    %45 = arith.subf %41, %44 : vector<8x8xf32>
    %46 = math.exp %45 : vector<8x8xf32>
    %cst_16 = arith.constant dense<0.000000e+00> : vector<8xf32>
    %47 = vector.multi_reduction <add>, %46, %cst_16 [1] : vector<8x8xf32> to vector<8xf32>
    %48 = vector.shape_cast %47 : vector<8xf32> to vector<8x1xf32>
    %cst_17 = arith.constant dense<0.000000e+00> : vector<8x8xf32>
    %49 = tpu.matmul %46, %40, %cst_17 {dimension_numbers = #tpu.dot_dimension_numbers<[1], [0], [0], [1], [0, 0, 1, 1], [], []>} : vector<8x8xf32>, vector<8x8xf32>, vector<8x8xf32> -> vector<8x8xf32>
    %50 = vector.broadcast %48 : vector<8x1xf32> to vector<8x8xf32>
    %51 = arith.divf %49, %50 : vector<8x8xf32>
    %c0_18 = arith.constant 0 : index
    %c8 = arith.constant 8 : index
    %52 = vector.load %arg3[%c0_18, %c8] : memref<16x32xf32, #tpu.memory_space<vmem>>, vector<8x8xf32>
    tpu.vector_store %arg3[%c0_18, %c8], %51 {strides = array<i32>} : memref<16x32xf32, #tpu.memory_space<vmem>>, vector<8x8xf32>,
    %53 = vector.extract_strided_slice %15 {offsets = [0, 16], sizes = [8, 8], strides = [1, 1]} : vector<16x32xf32> to vector<8x8xf32>
    %54 = vector.extract_strided_slice %22 {offsets = [0, 16], sizes = [8, 8], strides = [1, 1]} : vector<16x32xf32> to vector<8x8xf32>
    %55 = vector.extract_strided_slice %8 {offsets = [0, 16], sizes = [8, 8], strides = [1, 1]} : vector<16x32xf32> to vector<8x8xf32>
    %cst_19 = arith.constant dense<0.000000e+00> : vector<8x8xf32>
    %56 = tpu.matmul %53, %54, %cst_19 {dimension_numbers = #tpu.dot_dimension_numbers<[1], [1], [0], [0], [0, 0, 1, 0], [], []>} : vector<8x8xf32>, vector<8x8xf32>, vector<8x8xf32> -> vector<8x8xf32>
    %cst_20 = arith.constant dense<0xFF800000> : vector<8xf32>
    %57 = vector.multi_reduction <maximumf>, %56, %cst_20 [1] : vector<8x8xf32> to vector<8xf32>
    %58 = vector.shape_cast %57 : vector<8xf32> to vector<8x1xf32>
    %59 = vector.broadcast %58 : vector<8x1xf32> to vector<8x8xf32>
    %60 = arith.subf %56, %59 : vector<8x8xf32>
    %61 = math.exp %60 : vector<8x8xf32>
    %cst_21 = arith.constant dense<0.000000e+00> : vector<8xf32>
    %62 = vector.multi_reduction <add>, %61, %cst_21 [1] : vector<8x8xf32> to vector<8xf32>
    %63 = vector.shape_cast %62 : vector<8xf32> to vector<8x1xf32>
    %cst_22 = arith.constant dense<0.000000e+00> : vector<8x8xf32>
    %64 = tpu.matmul %61, %55, %cst_22 {dimension_numbers = #tpu.dot_dimension_numbers<[1], [0], [0], [1], [0, 0, 1, 1], [], []>} : vector<8x8xf32>, vector<8x8xf32>, vector<8x8xf32> -> vector<8x8xf32>
    %65 = vector.broadcast %63 : vector<8x1xf32> to vector<8x8xf32>
    %66 = arith.divf %64, %65 : vector<8x8xf32>
    %c0_23 = arith.constant 0 : index
    %c16 = arith.constant 16 : index
    %67 = vector.load %arg3[%c0_23, %c16] : memref<16x32xf32, #tpu.memory_space<vmem>>, vector<8x8xf32>
    tpu.vector_store %arg3[%c0_23, %c16], %66 {strides = array<i32>} : memref<16x32xf32, #tpu.memory_space<vmem>>, vector<8x8xf32>,
    %68 = vector.extract_strided_slice %15 {offsets = [0, 24], sizes = [8, 8], strides = [1, 1]} : vector<16x32xf32> to vector<8x8xf32>
    %69 = vector.extract_strided_slice %22 {offsets = [0, 24], sizes = [8, 8], strides = [1, 1]} : vector<16x32xf32> to vector<8x8xf32>
    %70 = vector.extract_strided_slice %8 {offsets = [0, 24], sizes = [8, 8], strides = [1, 1]} : vector<16x32xf32> to vector<8x8xf32>
    %cst_24 = arith.constant dense<0.000000e+00> : vector<8x8xf32>
    %71 = tpu.matmul %68, %69, %cst_24 {dimension_numbers = #tpu.dot_dimension_numbers<[1], [1], [0], [0], [0, 0, 1, 0], [], []>} : vector<8x8xf32>, vector<8x8xf32>, vector<8x8xf32> -> vector<8x8xf32>
    %cst_25 = arith.constant dense<0xFF800000> : vector<8xf32>
    %72 = vector.multi_reduction <maximumf>, %71, %cst_25 [1] : vector<8x8xf32> to vector<8xf32>
    %73 = vector.shape_cast %72 : vector<8xf32> to vector<8x1xf32>
    %74 = vector.broadcast %73 : vector<8x1xf32> to vector<8x8xf32>
    %75 = arith.subf %71, %74 : vector<8x8xf32>
    %76 = math.exp %75 : vector<8x8xf32>
    %cst_26 = arith.constant dense<0.000000e+00> : vector<8xf32>
    %77 = vector.multi_reduction <add>, %76, %cst_26 [1] : vector<8x8xf32> to vector<8xf32>
    %78 = vector.shape_cast %77 : vector<8xf32> to vector<8x1xf32>
    %cst_27 = arith.constant dense<0.000000e+00> : vector<8x8xf32>
    %79 = tpu.matmul %76, %70, %cst_27 {dimension_numbers = #tpu.dot_dimension_numbers<[1], [0], [0], [1], [0, 0, 1, 1], [], []>} : vector<8x8xf32>, vector<8x8xf32>, vector<8x8xf32> -> vector<8x8xf32>
    %80 = vector.broadcast %78 : vector<8x1xf32> to vector<8x8xf32>
    %81 = arith.divf %79, %80 : vector<8x8xf32>
    %c0_28 = arith.constant 0 : index
    %c24 = arith.constant 24 : index
    %82 = vector.load %arg3[%c0_28, %c24] : memref<16x32xf32, #tpu.memory_space<vmem>>, vector<8x8xf32>
    tpu.vector_store %arg3[%c0_28, %c24], %81 {strides = array<i32>} : memref<16x32xf32, #tpu.memory_space<vmem>>, vector<8x8xf32>,
    %83 = vector.extract_strided_slice %15 {offsets = [8, 0], sizes = [8, 8], strides = [1, 1]} : vector<16x32xf32> to vector<8x8xf32>
    %84 = vector.extract_strided_slice %22 {offsets = [8, 0], sizes = [8, 8], strides = [1, 1]} : vector<16x32xf32> to vector<8x8xf32>
    %85 = vector.extract_strided_slice %8 {offsets = [8, 0], sizes = [8, 8], strides = [1, 1]} : vector<16x32xf32> to vector<8x8xf32>
    %cst_29 = arith.constant dense<0.000000e+00> : vector<8x8xf32>
    %86 = tpu.matmul %83, %84, %cst_29 {dimension_numbers = #tpu.dot_dimension_numbers<[1], [1], [0], [0], [0, 0, 1, 0], [], []>} : vector<8x8xf32>, vector<8x8xf32>, vector<8x8xf32> -> vector<8x8xf32>
    %cst_30 = arith.constant dense<0xFF800000> : vector<8xf32>
    %87 = vector.multi_reduction <maximumf>, %86, %cst_30 [1] : vector<8x8xf32> to vector<8xf32>
    %88 = vector.shape_cast %87 : vector<8xf32> to vector<8x1xf32>
    %89 = vector.broadcast %88 : vector<8x1xf32> to vector<8x8xf32>
    %90 = arith.subf %86, %89 : vector<8x8xf32>
    %91 = math.exp %90 : vector<8x8xf32>
    %cst_31 = arith.constant dense<0.000000e+00> : vector<8xf32>
    %92 = vector.multi_reduction <add>, %91, %cst_31 [1] : vector<8x8xf32> to vector<8xf32>
    %93 = vector.shape_cast %92 : vector<8xf32> to vector<8x1xf32>
    %cst_32 = arith.constant dense<0.000000e+00> : vector<8x8xf32>
    %94 = tpu.matmul %91, %85, %cst_32 {dimension_numbers = #tpu.dot_dimension_numbers<[1], [0], [0], [1], [0, 0, 1, 1], [], []>} : vector<8x8xf32>, vector<8x8xf32>, vector<8x8xf32> -> vector<8x8xf32>
    %95 = vector.broadcast %93 : vector<8x1xf32> to vector<8x8xf32>
    %96 = arith.divf %94, %95 : vector<8x8xf32>
    %c8_33 = arith.constant 8 : index
    %c0_34 = arith.constant 0 : index
    %97 = vector.load %arg3[%c8_33, %c0_34] : memref<16x32xf32, #tpu.memory_space<vmem>>, vector<8x8xf32>
    tpu.vector_store %arg3[%c8_33, %c0_34], %96 {strides = array<i32>} : memref<16x32xf32, #tpu.memory_space<vmem>>, vector<8x8xf32>,
    %98 = vector.extract_strided_slice %15 {offsets = [8, 8], sizes = [8, 8], strides = [1, 1]} : vector<16x32xf32> to vector<8x8xf32>
    %99 = vector.extract_strided_slice %22 {offsets = [8, 8], sizes = [8, 8], strides = [1, 1]} : vector<16x32xf32> to vector<8x8xf32>
    %100 = vector.extract_strided_slice %8 {offsets = [8, 8], sizes = [8, 8], strides = [1, 1]} : vector<16x32xf32> to vector<8x8xf32>
    %cst_35 = arith.constant dense<0.000000e+00> : vector<8x8xf32>
    %101 = tpu.matmul %98, %99, %cst_35 {dimension_numbers = #tpu.dot_dimension_numbers<[1], [1], [0], [0], [0, 0, 1, 0], [], []>} : vector<8x8xf32>, vector<8x8xf32>, vector<8x8xf32> -> vector<8x8xf32>
    %cst_36 = arith.constant dense<0xFF800000> : vector<8xf32>
    %102 = vector.multi_reduction <maximumf>, %101, %cst_36 [1] : vector<8x8xf32> to vector<8xf32>
    %103 = vector.shape_cast %102 : vector<8xf32> to vector<8x1xf32>
    %104 = vector.broadcast %103 : vector<8x1xf32> to vector<8x8xf32>
    %105 = arith.subf %101, %104 : vector<8x8xf32>
    %106 = math.exp %105 : vector<8x8xf32>
    %cst_37 = arith.constant dense<0.000000e+00> : vector<8xf32>
    %107 = vector.multi_reduction <add>, %106, %cst_37 [1] : vector<8x8xf32> to vector<8xf32>
    %108 = vector.shape_cast %107 : vector<8xf32> to vector<8x1xf32>
    %cst_38 = arith.constant dense<0.000000e+00> : vector<8x8xf32>
    %109 = tpu.matmul %106, %100, %cst_38 {dimension_numbers = #tpu.dot_dimension_numbers<[1], [0], [0], [1], [0, 0, 1, 1], [], []>} : vector<8x8xf32>, vector<8x8xf32>, vector<8x8xf32> -> vector<8x8xf32>
    %110 = vector.broadcast %108 : vector<8x1xf32> to vector<8x8xf32>
    %111 = arith.divf %109, %110 : vector<8x8xf32>
    %c8_39 = arith.constant 8 : index
    %c8_40 = arith.constant 8 : index
    %112 = vector.load %arg3[%c8_39, %c8_40] : memref<16x32xf32, #tpu.memory_space<vmem>>, vector<8x8xf32>
    tpu.vector_store %arg3[%c8_39, %c8_40], %111 {strides = array<i32>} : memref<16x32xf32, #tpu.memory_space<vmem>>, vector<8x8xf32>,
    %113 = vector.extract_strided_slice %15 {offsets = [8, 16], sizes = [8, 8], strides = [1, 1]} : vector<16x32xf32> to vector<8x8xf32>
    %114 = vector.extract_strided_slice %22 {offsets = [8, 16], sizes = [8, 8], strides = [1, 1]} : vector<16x32xf32> to vector<8x8xf32>
    %115 = vector.extract_strided_slice %8 {offsets = [8, 16], sizes = [8, 8], strides = [1, 1]} : vector<16x32xf32> to vector<8x8xf32>
    %cst_41 = arith.constant dense<0.000000e+00> : vector<8x8xf32>
    %116 = tpu.matmul %113, %114, %cst_41 {dimension_numbers = #tpu.dot_dimension_numbers<[1], [1], [0], [0], [0, 0, 1, 0], [], []>} : vector<8x8xf32>, vector<8x8xf32>, vector<8x8xf32> -> vector<8x8xf32>
    %cst_42 = arith.constant dense<0xFF800000> : vector<8xf32>
    %117 = vector.multi_reduction <maximumf>, %116, %cst_42 [1] : vector<8x8xf32> to vector<8xf32>
    %118 = vector.shape_cast %117 : vector<8xf32> to vector<8x1xf32>
    %119 = vector.broadcast %118 : vector<8x1xf32> to vector<8x8xf32>
    %120 = arith.subf %116, %119 : vector<8x8xf32>
    %121 = math.exp %120 : vector<8x8xf32>
    %cst_43 = arith.constant dense<0.000000e+00> : vector<8xf32>
    %122 = vector.multi_reduction <add>, %121, %cst_43 [1] : vector<8x8xf32> to vector<8xf32>
    %123 = vector.shape_cast %122 : vector<8xf32> to vector<8x1xf32>
    %cst_44 = arith.constant dense<0.000000e+00> : vector<8x8xf32>
    %124 = tpu.matmul %121, %115, %cst_44 {dimension_numbers = #tpu.dot_dimension_numbers<[1], [0], [0], [1], [0, 0, 1, 1], [], []>} : vector<8x8xf32>, vector<8x8xf32>, vector<8x8xf32> -> vector<8x8xf32>
    %125 = vector.broadcast %123 : vector<8x1xf32> to vector<8x8xf32>
    %126 = arith.divf %124, %125 : vector<8x8xf32>
    %c8_45 = arith.constant 8 : index
    %c16_46 = arith.constant 16 : index
    %127 = vector.load %arg3[%c8_45, %c16_46] : memref<16x32xf32, #tpu.memory_space<vmem>>, vector<8x8xf32>
    tpu.vector_store %arg3[%c8_45, %c16_46], %126 {strides = array<i32>} : memref<16x32xf32, #tpu.memory_space<vmem>>, vector<8x8xf32>,
    %128 = vector.extract_strided_slice %15 {offsets = [8, 24], sizes = [8, 8], strides = [1, 1]} : vector<16x32xf32> to vector<8x8xf32>
    %129 = vector.extract_strided_slice %22 {offsets = [8, 24], sizes = [8, 8], strides = [1, 1]} : vector<16x32xf32> to vector<8x8xf32>
    %130 = vector.extract_strided_slice %8 {offsets = [8, 24], sizes = [8, 8], strides = [1, 1]} : vector<16x32xf32> to vector<8x8xf32>
    %cst_47 = arith.constant dense<0.000000e+00> : vector<8x8xf32>
    %131 = tpu.matmul %128, %129, %cst_47 {dimension_numbers = #tpu.dot_dimension_numbers<[1], [1], [0], [0], [0, 0, 1, 0], [], []>} : vector<8x8xf32>, vector<8x8xf32>, vector<8x8xf32> -> vector<8x8xf32>
    %cst_48 = arith.constant dense<0xFF800000> : vector<8xf32>
    %132 = vector.multi_reduction <maximumf>, %131, %cst_48 [1] : vector<8x8xf32> to vector<8xf32>
    %133 = vector.shape_cast %132 : vector<8xf32> to vector<8x1xf32>
    %134 = vector.broadcast %133 : vector<8x1xf32> to vector<8x8xf32>
    %135 = arith.subf %131, %134 : vector<8x8xf32>
    %136 = math.exp %135 : vector<8x8xf32>
    %cst_49 = arith.constant dense<0.000000e+00> : vector<8xf32>
    %137 = vector.multi_reduction <add>, %136, %cst_49 [1] : vector<8x8xf32> to vector<8xf32>
    %138 = vector.shape_cast %137 : vector<8xf32> to vector<8x1xf32>
    %cst_50 = arith.constant dense<0.000000e+00> : vector<8x8xf32>
    %139 = tpu.matmul %136, %130, %cst_50 {dimension_numbers = #tpu.dot_dimension_numbers<[1], [0], [0], [1], [0, 0, 1, 1], [], []>} : vector<8x8xf32>, vector<8x8xf32>, vector<8x8xf32> -> vector<8x8xf32>
    %140 = vector.broadcast %138 : vector<8x1xf32> to vector<8x8xf32>
    %141 = arith.divf %139, %140 : vector<8x8xf32>
    %c8_51 = arith.constant 8 : index
    %c24_52 = arith.constant 24 : index
    %142 = vector.load %arg3[%c8_51, %c24_52] : memref<16x32xf32, #tpu.memory_space<vmem>>, vector<8x8xf32>
    tpu.vector_store %arg3[%c8_51, %c24_52], %141 {strides = array<i32>} : memref<16x32xf32, #tpu.memory_space<vmem>>, vector<8x8xf32>,
    %c0_53 = arith.constant 0 : index
    %c0_54 = arith.constant 0 : index
    %143 = vector.load %arg3[%c0_53, %c0_54] : memref<16x32xf32, #tpu.memory_space<vmem>>, vector<16x32xf32>
    %c0_55 = arith.constant 0 : index
    %c96_56 = arith.constant 96 : index
    %144 = vector.load %arg1[%c0_55, %c96_56] : memref<32x128xf32, #tpu.memory_space<vmem>>, vector<32x32xf32>
    %cst_57 = arith.constant dense<0.000000e+00> : vector<16x32xf32>
    %145 = tpu.matmul %143, %144, %cst_57 {dimension_numbers = #tpu.dot_dimension_numbers<[1], [0], [0], [1], [0, 0, 1, 1], [], []>} : vector<16x32xf32>, vector<32x32xf32>, vector<16x32xf32> -> vector<16x32xf32>
    %c0_58 = arith.constant 0 : index
    %c0_59 = arith.constant 0 : index
    %146 = vector.load %arg2[%c0_58, %c0_59] : memref<16x32xf32, #tpu.memory_space<vmem>>, vector<16x32xf32>
    tpu.vector_store %arg2[%c0_58, %c0_59], %145 {strides = array<i32>} : memref<16x32xf32, #tpu.memory_space<vmem>>, vector<16x32xf32>,
    return
  }
}

</mosaic_0001>

<llo_original>
// kernel: attention_block_forward.1
$region0: #{attention_block_forward.1}
  #allocation0 [shape = 'u32[]', space=smem, size = 0x4, offset = 0x4, fixed_abs, tag = 'smem constant byte address 0x4 - core index']
  #allocation1 [shape = 'u32[144,128]{1,0:T(1,128)}', space=vmem, size = 0x12000, scoped, tag = 'internal scratch']
  #allocation2 [shape = 'f32[16,32]{1,0:T(8,128)}', space=vmem, size = 0x2000, scoped, tag = 'scratch operand']
  %s0 = inlined_call_operand.vmem [shape: f32[16,128], index: 0, kind: input, shape index: {}]
  %s1 = inlined_call_operand.vmem [shape: f32[32,128], index: 1, kind: input, shape index: {}]
  %s2 = inlined_call_operand.hbm [shape: f32[16,32], index: 2, kind: output, shape index: {}]
  %s3 = sld [smem:[#allocation0]]
  $region18: #{attention_block_forward.1} parent=0
    _
  %s5 = ssub.s32 1, %s3
  %s6 = scalar_select 0, %s5, %s3
  $region1: #{attention_block_forward.1} parent=0
    #allocation3 [shape = 'u8[8192]{0}', space=vmem, size = 0x2000, scoped, tag = 'output window, operand 0, single buffered']
    #allocation4 [shape = 's32[1]{0}', space=sflag, size = 0x4, scoped, tag = 'scoped memory for attention_block_forward.1']
    %7 = vsyncpa [#allocation4], 0
    // Predicated region
    $region2: #{attention_block_forward.1} parent=1 // pred_check
      _
    $region3: #{attention_block_forward.1} parent=1 // pred_check_branch
      %9 = sbr.rel (0) target = $region5
    $region4: #{attention_block_forward.1} parent=1 // pred_region
      _
    $region5: #{attention_block_forward.1} parent=1 // pred_fallthru
      _
    // Predicated region
    $region6: #{attention_block_forward.1} parent=1 // pred_check
      _
    $region7: #{attention_block_forward.1} parent=1 // pred_check_branch
      %11 = sbr.rel (0) target = $region9
    $region8: #{attention_block_forward.1} parent=1 // pred_region
      _
    $region9: #{attention_block_forward.1} parent=1 // pred_fallthru
      _
    %v12 = vld [vmem:[%s0] sm:$0xff]
    %v13 = vld [vmem:[%s0 + $0x8] sm:$0xff]
    %v14 = vld [vmem:[%s1] sm:$0xff]
    %v15 = vld [vmem:[%s1 + $0x8] sm:$0xff]
    %v16 = vld [vmem:[%s1 + $0x10] sm:$0xff]
    %v17 = vld [vmem:[%s1 + $0x18] sm:$0xff]
    %vm18 = vcmask 261120
    %v20 = vsel %vm18, %v12, 0
    %v23 = vsel %vm18, %v13, 0
    %25 = vmatprep.subr.mxu0 0.0
    %26 = vmatpush1.msra.mxu0 0.0
    %27 = vmatprep.subr.mxu0 0.0
    %28 = vmatpush1.msra.mxu0 0.0
    %29 = vmatprep.subr.mxu0 0.0
    %30 = vmatpush1.msra.mxu0 0.0
    %31 = vmatprep.subr.mxu0 0.0
    %32 = vmatpush1.msra.mxu0 0.0
    %33 = vmatprep.subr.mxu0 0.0
    %34 = vmatpush1.msra.mxu0 0.0
    %35 = vmatprep.subr.mxu0 0.0
    %36 = vmatpush1.msra.mxu0 0.0
    %37 = vmatprep.subr.mxu0 0.0
    %38 = vmatpush1.msra.mxu0 0.0
    %39 = vmatprep.subr.mxu0 0.0
    %40 = vmatpush1.msra.mxu0 0.0
    %41 = vmatprep.subr.mxu0 0.0
    %42 = vmatpush1.msra.mxu0 0.0
    %43 = vmatprep.subr.mxu0 0.0
    %44 = vmatpush1.msra.mxu0 0.0
    %45 = vmatprep.subr.mxu0 0.0
    %46 = vmatpush1.msra.mxu0 0.0
    %47 = vmatprep.subr.mxu0 0.0
    %48 = vmatpush1.msra.mxu0 0.0
    %49 = vmatprep.subr.mxu0 0.0
    %50 = vmatpush1.msra.mxu0 %v17
    %51 = vmatprep.subr.mxu0 0.0
    %52 = vmatpush1.msra.mxu0 %v16
    %53 = vmatprep.subr.mxu0 0.0
    %54 = vmatpush1.msra.mxu0 %v15
    %55 = vmatprep.subr.mxu0 0.0
    %56 = vmatpush1.msra.mxu0 %v14
    %57 = vmatprep.subr.mxu0 0.0
    %58 = vmatpush2.msra.mxu0 0.0
    %59 = vmatprep.subr.mxu0 0.0
    %60 = vmatpush2.msra.mxu0 0.0
    %61 = vmatprep.subr.mxu0 0.0
    %62 = vmatpush2.msra.mxu0 0.0
    %63 = vmatprep.subr.mxu0 0.0
    %64 = vmatpush2.msra.mxu0 0.0
    %65 = vmatprep.subr.mxu0 0.0
    %66 = vmatpush2.msra.mxu0 0.0
    %67 = vmatprep.subr.mxu0 0.0
    %68 = vmatpush2.msra.mxu0 0.0
    %69 = vmatprep.subr.mxu0 0.0
    %70 = vmatpush2.msra.mxu0 0.0
    %71 = vmatprep.subr.mxu0 0.0
    %72 = vmatpush2.msra.mxu0 0.0
    %73 = vmatprep.subr.mxu0 0.0
    %74 = vmatpush2.msra.mxu0 0.0
    %75 = vmatprep.subr.mxu0 0.0
    %76 = vmatpush2.msra.mxu0 0.0
    %77 = vmatprep.subr.mxu0 0.0
    %78 = vmatpush2.msra.mxu0 0.0
    %79 = vmatprep.subr.mxu0 0.0
    %80 = vmatpush2.msra.mxu0 0.0
    %81 = vmatprep.subr.mxu0 0.0
    %82 = vmatpush2.msra.mxu0 0.0
    %83 = vmatprep.subr.mxu0 0.0
    %84 = vmatpush2.msra.mxu0 0.0
    %85 = vmatprep.subr.mxu0 0.0
    %86 = vmatpush2.msra.mxu0 0.0
    %87 = vmatprep.subr.mxu0 0.0
    %88 = vmatpush2.msra.mxu0 0.0
    %89 = vmatprep.mubr.f32.mxu0 0.0
    %90 = vmatmul.mubr.f32.gmra.mxu0 %v20
    %v91 = vpop.f32.mrf.mxu0
    %v92 = vadd.f32 0.0, %v91
    %v93 = vpop.f32.mrf.mxu0
    %94 = vmatprep.mubr.f32.mxu0 0.0
    %95 = vmatmul.mubr.f32.gmra.mxu0 %v23
    %v96 = vpop.f32.mrf.mxu0
    %v97 = vadd.f32 0.0, %v96
    %v98 = vpop.f32.mrf.mxu0
    %99 = vdwg.mxu0
    %vm100 = vcmask 1047808
    %101 = vrot.lane.b32.xlu0 %v92, 32
    %v102 = vpop.permute.xlu0 %101
    %v103 = vsel %vm100, %v102, %v92
    %104 = vrot.lane.b32.xlu0 %v97, 32
    %v105 = vpop.permute.xlu0 %104
    %v106 = vsel %vm100, %v105, %v97
    %107 = vrot.lane.b32.xlu0 %v103, 32
    %v108 = vpop.permute.xlu0 %107
    %109 = vrot.lane.b32.xlu0 %v106, 32
    %v110 = vpop.permute.xlu0 %109
    %v111 = vsel %vm100, %v108, %v92
    %v112 = vsel %vm100, %v110, %v97
    %113 = vrot.lane.b32.xlu0 %v12, 96
    %v114 = vpop.permute.xlu0 %113
    %115 = vrot.lane.b32.xlu0 %v13, 96
    %v116 = vpop.permute.xlu0 %115
    %v119 = vmul.f32 %v92, %v114
    %v120 = vmul.f32 %v97, %v116
    %121 = vrot.lane.b32.xlu0 %v12, 68
    %v122 = vpop.permute.xlu0 %121
    %123 = vrot.lane.b32.xlu0 %v13, 68
    %v124 = vpop.permute.xlu0 %123
    %v127 = vmul.f32 %v111, %v122
    %v128 = vmul.f32 %v112, %v124
    %131 = vrot.lane.b32.xlu0 %v127, 124
    %v132 = vpop.permute.xlu0 %131
    %133 = vrot.lane.b32.xlu0 %v128, 124
    %v134 = vpop.permute.xlu0 %133
    %v137 = vadd.f32 %v119, %v132
    %v138 = vadd.f32 %v120, %v134
    %139 = vrot.lane.b32.xlu0 %v12, 60
    %v140 = vpop.permute.xlu0 %139
    %141 = vrot.lane.b32.xlu0 %v13, 60
    %v142 = vpop.permute.xlu0 %141
    %v145 = vmul.f32 %v111, %v140
    %v146 = vmul.f32 %v112, %v142
    %149 = vrot.lane.b32.xlu0 %v145, 100
    %v150 = vpop.permute.xlu0 %149
    %151 = vrot.lane.b32.xlu0 %v146, 100
    %v152 = vpop.permute.xlu0 %151
    %v155 = vadd.f32 %v137, %v150
    %v156 = vadd.f32 %v138, %v152
    %159 = vrot.lane.b32.xlu0 %v92, 96
    %v160 = vpop.permute.xlu0 %159
    %161 = vrot.lane.b32.xlu0 %v97, 96
    %v162 = vpop.permute.xlu0 %161
    %165 = vrot.lane.b32.xlu0 %v160, 32
    %v166 = vpop.permute.xlu0 %165
    %v167 = vsel %vm100, %v166, %v160
    %168 = vrot.lane.b32.xlu0 %v162, 32
    %v169 = vpop.permute.xlu0 %168
    %v170 = vsel %vm100, %v169, %v162
    %171 = vrot.lane.b32.xlu0 %v167, 32
    %v172 = vpop.permute.xlu0 %171
    %173 = vrot.lane.b32.xlu0 %v170, 32
    %v174 = vpop.permute.xlu0 %173
    %v175 = vsel %vm100, %v172, %v160
    %v176 = vsel %vm100, %v174, %v162
    %v177 = vmul.f32 %v92, %v12
    %v178 = vmul.f32 %v97, %v13
    %v179 = vmul.f32 %v175, %v122
    %v180 = vmul.f32 %v176, %v124
    %183 = vrot.lane.b32.xlu0 %v179, 28
    %v184 = vpop.permute.xlu0 %183
    %185 = vrot.lane.b32.xlu0 %v180, 28
    %v186 = vpop.permute.xlu0 %185
    %v189 = vadd.f32 %v177, %v184
    %v190 = vadd.f32 %v178, %v186
    %v191 = vmul.f32 %v175, %v140
    %v192 = vmul.f32 %v176, %v142
    %195 = vrot.lane.b32.xlu0 %v191, 4
    %v196 = vpop.permute.xlu0 %195
    %197 = vrot.lane.b32.xlu0 %v192, 4
    %v198 = vpop.permute.xlu0 %197
    %v201 = vadd.f32 %v189, %v196
    %v202 = vadd.f32 %v190, %v198
    %204 = vrot.lane.b32.xlu0 %v201, 96
    %v205 = vpop.permute.xlu0 %204
    %vm206 = vcmask 64512
    %v208 = vsel %vm206, %v155, 0
    %v210 = vsel %vm206, %v205, 0
    %212 = vmatprep.subr.mxu0 0.0
    %213 = vmatpush1.xpose.msra.mxu0 0.0
    %214 = vmatprep.subr.mxu0 0.0
    %215 = vmatpush1.xpose.msra.mxu0 0.0
    %216 = vmatprep.subr.mxu0 0.0
    %217 = vmatpush1.xpose.msra.mxu0 0.0
    %218 = vmatprep.subr.mxu0 0.0
    %219 = vmatpush1.xpose.msra.mxu0 0.0
    %220 = vmatprep.subr.mxu0 0.0
    %221 = vmatpush1.xpose.msra.mxu0 0.0
    %222 = vmatprep.subr.mxu0 0.0
    %223 = vmatpush1.xpose.msra.mxu0 0.0
    %224 = vmatprep.subr.mxu0 0.0
    %225 = vmatpush1.xpose.msra.mxu0 0.0
    %226 = vmatprep.subr.mxu0 0.0
    %227 = vmatpush1.xpose.msra.mxu0 0.0
    %228 = vmatprep.subr.mxu0 0.0
    %229 = vmatpush1.xpose.msra.mxu0 0.0
    %230 = vmatprep.subr.mxu0 0.0
    %231 = vmatpush1.xpose.msra.mxu0 0.0
    %232 = vmatprep.subr.mxu0 0.0
    %233 = vmatpush1.xpose.msra.mxu0 0.0
    %234 = vmatprep.subr.mxu0 0.0
    %235 = vmatpush1.xpose.msra.mxu0 0.0
    %236 = vmatprep.subr.mxu0 0.0
    %237 = vmatpush1.xpose.msra.mxu0 0.0
    %238 = vmatprep.subr.mxu0 0.0
    %239 = vmatpush1.xpose.msra.mxu0 0.0
    %240 = vmatprep.subr.mxu0 0.0
    %241 = vmatpush1.xpose.msra.mxu0 0.0
    %242 = vmatprep.subr.mxu0 0.0
    %243 = vmatpush1.xpose.msra.mxu0 %v210
    %244 = vmatprep.subr.mxu0 0.0
    %245 = vmatpush2.xpose.msra.mxu0 0.0
    %246 = vmatprep.subr.mxu0 0.0
    %247 = vmatpush2.xpose.msra.mxu0 0.0
    %248 = vmatprep.subr.mxu0 0.0
    %249 = vmatpush2.xpose.msra.mxu0 0.0
    %250 = vmatprep.subr.mxu0 0.0
    %251 = vmatpush2.xpose.msra.mxu0 0.0
    %252 = vmatprep.subr.mxu0 0.0
    %253 = vmatpush2.xpose.msra.mxu0 0.0
    %254 = vmatprep.subr.mxu0 0.0
    %255 = vmatpush2.xpose.msra.mxu0 0.0
    %256 = vmatprep.subr.mxu0 0.0
    %257 = vmatpush2.xpose.msra.mxu0 0.0
    %258 = vmatprep.subr.mxu0 0.0
    %259 = vmatpush2.xpose.msra.mxu0 0.0
    %260 = vmatprep.subr.mxu0 0.0
    %261 = vmatpush2.xpose.msra.mxu0 0.0
    %262 = vmatprep.subr.mxu0 0.0
    %263 = vmatpush2.xpose.msra.mxu0 0.0
    %264 = vmatprep.subr.mxu0 0.0
    %265 = vmatpush2.xpose.msra.mxu0 0.0
    %266 = vmatprep.subr.mxu0 0.0
    %267 = vmatpush2.xpose.msra.mxu0 0.0
    %268 = vmatprep.subr.mxu0 0.0
    %269 = vmatpush2.xpose.msra.mxu0 0.0
    %270 = vmatprep.subr.mxu0 0.0
    %271 = vmatpush2.xpose.msra.mxu0 0.0
    %272 = vmatprep.subr.mxu0 0.0
    %273 = vmatpush2.xpose.msra.mxu0 0.0
    %274 = vmatprep.subr.mxu0 0.0
    %275 = vmatpush2.xpose.msra.mxu0 0.0
    %276 = vmatprep.mubr.f32.mxu0 0.0
    %277 = vmatmul.mubr.f32.gmra.mxu0 %v208
    %v278 = vpop.f32.mrf.mxu0
    %v279 = vadd.f32 0.0, %v278
    %v280 = vpop.f32.mrf.mxu0
    %281 = vdwg.mxu0
    %v282 = vsel %vm206, %v279, -inf
    %283 = vmax.xlane.f32.xlu0 %v282
    %v284 = vpop.xlane.xlu0 %283
    %v285 = vsub.f32 %v279, %v284
    %v286 = vmul.f32 %v285, 1.442695
    %v287 = vpow.pop %v286
    %v288 = vsel %vm206, %v287, 0.0
    %289 = vadd.xlane.f32.xlu0 %v288
    %v290 = vpop.xlane.xlu0 %289
    %291 = vrot.lane.b32.xlu0 %v92, 64
    %v292 = vpop.permute.xlu0 %291
    %v295 = vsel %vm206, %v287, 0
    %297 = vmatprep.subr.mxu0 0.0
    %298 = vmatpush1.msra.mxu0 0.0
    %299 = vmatprep.subr.mxu0 0.0
    %300 = vmatpush1.msra.mxu0 0.0
    %301 = vmatprep.subr.mxu0 0.0
    %302 = vmatpush1.msra.mxu0 0.0
    %303 = vmatprep.subr.mxu0 0.0
    %304 = vmatpush1.msra.mxu0 0.0
    %305 = vmatprep.subr.mxu0 0.0
    %306 = vmatpush1.msra.mxu0 0.0
    %307 = vmatprep.subr.mxu0 0.0
    %308 = vmatpush1.msra.mxu0 0.0
    %309 = vmatprep.subr.mxu0 0.0
    %310 = vmatpush1.msra.mxu0 0.0
    %311 = vmatprep.subr.mxu0 0.0
    %312 = vmatpush1.msra.mxu0 0.0
    %313 = vmatprep.subr.mxu0 0.0
    %314 = vmatpush1.msra.mxu0 0.0
    %315 = vmatprep.subr.mxu0 0.0
    %316 = vmatpush1.msra.mxu0 0.0
    %317 = vmatprep.subr.mxu0 0.0
    %318 = vmatpush1.msra.mxu0 0.0
    %319 = vmatprep.subr.mxu0 0.0
    %320 = vmatpush1.msra.mxu0 0.0
    %321 = vmatprep.subr.mxu0 0.0
    %322 = vmatpush1.msra.mxu0 0.0
    %323 = vmatprep.subr.mxu0 0.0
    %324 = vmatpush1.msra.mxu0 0.0
    %325 = vmatprep.subr.mxu0 0.0
    %326 = vmatpush1.msra.mxu0 0.0
    %327 = vmatprep.subr.mxu0 0.0
    %328 = vmatpush1.msra.mxu0 %v292
    %329 = vmatprep.subr.mxu0 0.0
    %330 = vmatpush2.msra.mxu0 0.0
    %331 = vmatprep.subr.mxu0 0.0
    %332 = vmatpush2.msra.mxu0 0.0
    %333 = vmatprep.subr.mxu0 0.0
    %334 = vmatpush2.msra.mxu0 0.0
    %335 = vmatprep.subr.mxu0 0.0
    %336 = vmatpush2.msra.mxu0 0.0
    %337 = vmatprep.subr.mxu0 0.0
    %338 = vmatpush2.msra.mxu0 0.0
    %339 = vmatprep.subr.mxu0 0.0
    %340 = vmatpush2.msra.mxu0 0.0
    %341 = vmatprep.subr.mxu0 0.0
    %342 = vmatpush2.msra.mxu0 0.0
    %343 = vmatprep.subr.mxu0 0.0
    %344 = vmatpush2.msra.mxu0 0.0
    %345 = vmatprep.subr.mxu0 0.0
    %346 = vmatpush2.msra.mxu0 0.0
    %347 = vmatprep.subr.mxu0 0.0
    %348 = vmatpush2.msra.mxu0 0.0
    %349 = vmatprep.subr.mxu0 0.0
    %350 = vmatpush2.msra.mxu0 0.0
    %351 = vmatprep.subr.mxu0 0.0
    %352 = vmatpush2.msra.mxu0 0.0
    %353 = vmatprep.subr.mxu0 0.0
    %354 = vmatpush2.msra.mxu0 0.0
    %355 = vmatprep.subr.mxu0 0.0
    %356 = vmatpush2.msra.mxu0 0.0
    %357 = vmatprep.subr.mxu0 0.0
    %358 = vmatpush2.msra.mxu0 0.0
    %359 = vmatprep.subr.mxu0 0.0
    %360 = vmatpush2.msra.mxu0 0.0
    %361 = vmatprep.mubr.f32.mxu0 0.0
    %362 = vmatmul.mubr.f32.gmra.mxu0 %v295
    %v363 = vpop.f32.mrf.mxu0
    %v364 = vadd.f32 0.0, %v363
    %v365 = vpop.f32.mrf.mxu0
    %366 = vdwg.mxu0
    %v367 = vrcp.pop %v290
    %v368 = vmul.f32 %v364, %v367
    %369 = vst.msk [vmem:[#allocation2] sm:$0xff] %vm206, %v368
    %370 = vrot.lane.b32.xlu0 %v155, 120
    %v371 = vpop.permute.xlu0 %370
    %372 = vrot.lane.b32.xlu0 %v201, 88
    %v373 = vpop.permute.xlu0 %372
    %v374 = vsel %vm206, %v371, 0
    %v376 = vsel %vm206, %v373, 0
    %378 = vmatprep.subr.mxu0 0.0
    %379 = vmatpush1.xpose.msra.mxu0 0.0
    %380 = vmatprep.subr.mxu0 0.0
    %381 = vmatpush1.xpose.msra.mxu0 0.0
    %382 = vmatprep.subr.mxu0 0.0
    %383 = vmatpush1.xpose.msra.mxu0 0.0
    %384 = vmatprep.subr.mxu0 0.0
    %385 = vmatpush1.xpose.msra.mxu0 0.0
    %386 = vmatprep.subr.mxu0 0.0
    %387 = vmatpush1.xpose.msra.mxu0 0.0
    %388 = vmatprep.subr.mxu0 0.0
    %389 = vmatpush1.xpose.msra.mxu0 0.0
    %390 = vmatprep.subr.mxu0 0.0
    %391 = vmatpush1.xpose.msra.mxu0 0.0
    %392 = vmatprep.subr.mxu0 0.0
    %393 = vmatpush1.xpose.msra.mxu0 0.0
    %394 = vmatprep.subr.mxu0 0.0
    %395 = vmatpush1.xpose.msra.mxu0 0.0
    %396 = vmatprep.subr.mxu0 0.0
    %397 = vmatpush1.xpose.msra.mxu0 0.0
    %398 = vmatprep.subr.mxu0 0.0
    %399 = vmatpush1.xpose.msra.mxu0 0.0
    %400 = vmatprep.subr.mxu0 0.0
    %401 = vmatpush1.xpose.msra.mxu0 0.0
    %402 = vmatprep.subr.mxu0 0.0
    %403 = vmatpush1.xpose.msra.mxu0 0.0
    %404 = vmatprep.subr.mxu0 0.0
    %405 = vmatpush1.xpose.msra.mxu0 0.0
    %406 = vmatprep.subr.mxu0 0.0
    %407 = vmatpush1.xpose.msra.mxu0 0.0
    %408 = vmatprep.subr.mxu0 0.0
    %409 = vmatpush1.xpose.msra.mxu0 %v376
    %410 = vmatprep.subr.mxu0 0.0
    %411 = vmatpush2.xpose.msra.mxu0 0.0
    %412 = vmatprep.subr.mxu0 0.0
    %413 = vmatpush2.xpose.msra.mxu0 0.0
    %414 = vmatprep.subr.mxu0 0.0
    %415 = vmatpush2.xpose.msra.mxu0 0.0
    %416 = vmatprep.subr.mxu0 0.0
    %417 = vmatpush2.xpose.msra.mxu0 0.0
    %418 = vmatprep.subr.mxu0 0.0
    %419 = vmatpush2.xpose.msra.mxu0 0.0
    %420 = vmatprep.subr.mxu0 0.0
    %421 = vmatpush2.xpose.msra.mxu0 0.0
    %422 = vmatprep.subr.mxu0 0.0
    %423 = vmatpush2.xpose.msra.mxu0 0.0
    %424 = vmatprep.subr.mxu0 0.0
    %425 = vmatpush2.xpose.msra.mxu0 0.0
    %426 = vmatprep.subr.mxu0 0.0
    %427 = vmatpush2.xpose.msra.mxu0 0.0
    %428 = vmatprep.subr.mxu0 0.0
    %429 = vmatpush2.xpose.msra.mxu0 0.0
    %430 = vmatprep.subr.mxu0 0.0
    %431 = vmatpush2.xpose.msra.mxu0 0.0
    %432 = vmatprep.subr.mxu0 0.0
    %433 = vmatpush2.xpose.msra.mxu0 0.0
    %434 = vmatprep.subr.mxu0 0.0
    %435 = vmatpush2.xpose.msra.mxu0 0.0
    %436 = vmatprep.subr.mxu0 0.0
    %437 = vmatpush2.xpose.msra.mxu0 0.0
    %438 = vmatprep.subr.mxu0 0.0
    %439 = vmatpush2.xpose.msra.mxu0 0.0
    %440 = vmatprep.subr.mxu0 0.0
    %441 = vmatpush2.xpose.msra.mxu0 0.0
    %442 = vmatprep.mubr.f32.mxu0 0.0
    %443 = vmatmul.mubr.f32.gmra.mxu0 %v374
    %v444 = vpop.f32.mrf.mxu0
    %v445 = vadd.f32 0.0, %v444
    %v446 = vpop.f32.mrf.mxu0
    %447 = vdwg.mxu0
    %v448 = vsel %vm206, %v445, -inf
    %449 = vmax.xlane.f32.xlu0 %v448
    %v450 = vpop.xlane.xlu0 %449
    %v451 = vsub.f32 %v445, %v450
    %v452 = vmul.f32 %v451, 1.442695
    %v453 = vpow.pop %v452
    %v454 = vsel %vm206, %v453, 0.0
    %455 = vadd.xlane.f32.xlu0 %v454
    %v456 = vpop.xlane.xlu0 %455
    %457 = vrot.lane.b32.xlu0 %v92, 56
    %v458 = vpop.permute.xlu0 %457
    %v461 = vsel %vm206, %v453, 0
    %463 = vmatprep.subr.mxu0 0.0
    %464 = vmatpush1.msra.mxu0 0.0
    %465 = vmatprep.subr.mxu0 0.0
    %466 = vmatpush1.msra.mxu0 0.0
    %467 = vmatprep.subr.mxu0 0.0
    %468 = vmatpush1.msra.mxu0 0.0
    %469 = vmatprep.subr.mxu0 0.0
    %470 = vmatpush1.msra.mxu0 0.0
    %471 = vmatprep.subr.mxu0 0.0
    %472 = vmatpush1.msra.mxu0 0.0
    %473 = vmatprep.subr.mxu0 0.0
    %474 = vmatpush1.msra.mxu0 0.0
    %475 = vmatprep.subr.mxu0 0.0
    %476 = vmatpush1.msra.mxu0 0.0
    %477 = vmatprep.subr.mxu0 0.0
    %478 = vmatpush1.msra.mxu0 0.0
    %479 = vmatprep.subr.mxu0 0.0
    %480 = vmatpush1.msra.mxu0 0.0
    %481 = vmatprep.subr.mxu0 0.0
    %482 = vmatpush1.msra.mxu0 0.0
    %483 = vmatprep.subr.mxu0 0.0
    %484 = vmatpush1.msra.mxu0 0.0
    %485 = vmatprep.subr.mxu0 0.0
    %486 = vmatpush1.msra.mxu0 0.0
    %487 = vmatprep.subr.mxu0 0.0
    %488 = vmatpush1.msra.mxu0 0.0
    %489 = vmatprep.subr.mxu0 0.0
    %490 = vmatpush1.msra.mxu0 0.0
    %491 = vmatprep.subr.mxu0 0.0
    %492 = vmatpush1.msra.mxu0 0.0
    %493 = vmatprep.subr.mxu0 0.0
    %494 = vmatpush1.msra.mxu0 %v458
    %495 = vmatprep.subr.mxu0 0.0
    %496 = vmatpush2.msra.mxu0 0.0
    %497 = vmatprep.subr.mxu0 0.0
    %498 = vmatpush2.msra.mxu0 0.0
    %499 = vmatprep.subr.mxu0 0.0
    %500 = vmatpush2.msra.mxu0 0.0
    %501 = vmatprep.subr.mxu0 0.0
    %502 = vmatpush2.msra.mxu0 0.0
    %503 = vmatprep.subr.mxu0 0.0
    %504 = vmatpush2.msra.mxu0 0.0
    %505 = vmatprep.subr.mxu0 0.0
    %506 = vmatpush2.msra.mxu0 0.0
    %507 = vmatprep.subr.mxu0 0.0
    %508 = vmatpush2.msra.mxu0 0.0
    %509 = vmatprep.subr.mxu0 0.0
    %510 = vmatpush2.msra.mxu0 0.0
    %511 = vmatprep.subr.mxu0 0.0
    %512 = vmatpush2.msra.mxu0 0.0
    %513 = vmatprep.subr.mxu0 0.0
    %514 = vmatpush2.msra.mxu0 0.0
    %515 = vmatprep.subr.mxu0 0.0
    %516 = vmatpush2.msra.mxu0 0.0
    %517 = vmatprep.subr.mxu0 0.0
    %518 = vmatpush2.msra.mxu0 0.0
    %519 = vmatprep.subr.mxu0 0.0
    %520 = vmatpush2.msra.mxu0 0.0
    %521 = vmatprep.subr.mxu0 0.0
    %522 = vmatpush2.msra.mxu0 0.0
    %523 = vmatprep.subr.mxu0 0.0
    %524 = vmatpush2.msra.mxu0 0.0
    %525 = vmatprep.subr.mxu0 0.0
    %526 = vmatpush2.msra.mxu0 0.0
    %527 = vmatprep.mubr.f32.mxu0 0.0
    %528 = vmatmul.mubr.f32.gmra.mxu0 %v461
    %v529 = vpop.f32.mrf.mxu0
    %v530 = vadd.f32 0.0, %v529
    %v531 = vpop.f32.mrf.mxu0
    %532 = vdwg.mxu0
    %v533 = vrcp.pop %v456
    %v534 = vmul.f32 %v530, %v533
    %536 = vrot.lane.b32.xlu0 %v534, 8
    %v537 = vpop.permute.xlu0 %536
    %vm539 = vcmask 130112
    %540 = vst.msk [vmem:[#allocation2] sm:$0xff] %vm539, %v537
    %541 = vrot.lane.b32.xlu0 %v155, 112
    %v542 = vpop.permute.xlu0 %541
    %543 = vrot.lane.b32.xlu0 %v201, 80
    %v544 = vpop.permute.xlu0 %543
    %v545 = vsel %vm206, %v542, 0
    %v547 = vsel %vm206, %v544, 0
    %549 = vmatprep.subr.mxu0 0.0
    %550 = vmatpush1.xpose.msra.mxu0 0.0
    %551 = vmatprep.subr.mxu0 0.0
    %552 = vmatpush1.xpose.msra.mxu0 0.0
    %553 = vmatprep.subr.mxu0 0.0
    %554 = vmatpush1.xpose.msra.mxu0 0.0
    %555 = vmatprep.subr.mxu0 0.0
    %556 = vmatpush1.xpose.msra.mxu0 0.0
    %557 = vmatprep.subr.mxu0 0.0
    %558 = vmatpush1.xpose.msra.mxu0 0.0
    %559 = vmatprep.subr.mxu0 0.0
    %560 = vmatpush1.xpose.msra.mxu0 0.0
    %561 = vmatprep.subr.mxu0 0.0
    %562 = vmatpush1.xpose.msra.mxu0 0.0
    %563 = vmatprep.subr.mxu0 0.0
    %564 = vmatpush1.xpose.msra.mxu0 0.0
    %565 = vmatprep.subr.mxu0 0.0
    %566 = vmatpush1.xpose.msra.mxu0 0.0
    %567 = vmatprep.subr.mxu0 0.0
    %568 = vmatpush1.xpose.msra.mxu0 0.0
    %569 = vmatprep.subr.mxu0 0.0
    %570 = vmatpush1.xpose.msra.mxu0 0.0
    %571 = vmatprep.subr.mxu0 0.0
    %572 = vmatpush1.xpose.msra.mxu0 0.0
    %573 = vmatprep.subr.mxu0 0.0
    %574 = vmatpush1.xpose.msra.mxu0 0.0
    %575 = vmatprep.subr.mxu0 0.0
    %576 = vmatpush1.xpose.msra.mxu0 0.0
    %577 = vmatprep.subr.mxu0 0.0
    %578 = vmatpush1.xpose.msra.mxu0 0.0
    %579 = vmatprep.subr.mxu0 0.0
    %580 = vmatpush1.xpose.msra.mxu0 %v547
    %581 = vmatprep.subr.mxu0 0.0
    %582 = vmatpush2.xpose.msra.mxu0 0.0
    %583 = vmatprep.subr.mxu0 0.0
    %584 = vmatpush2.xpose.msra.mxu0 0.0
    %585 = vmatprep.subr.mxu0 0.0
    %586 = vmatpush2.xpose.msra.mxu0 0.0
    %587 = vmatprep.subr.mxu0 0.0
    %588 = vmatpush2.xpose.msra.mxu0 0.0
    %589 = vmatprep.subr.mxu0 0.0
    %590 = vmatpush2.xpose.msra.mxu0 0.0
    %591 = vmatprep.subr.mxu0 0.0
    %592 = vmatpush2.xpose.msra.mxu0 0.0
    %593 = vmatprep.subr.mxu0 0.0
    %594 = vmatpush2.xpose.msra.mxu0 0.0
    %595 = vmatprep.subr.mxu0 0.0
    %596 = vmatpush2.xpose.msra.mxu0 0.0
    %597 = vmatprep.subr.mxu0 0.0
    %598 = vmatpush2.xpose.msra.mxu0 0.0
    %599 = vmatprep.subr.mxu0 0.0
    %600 = vmatpush2.xpose.msra.mxu0 0.0
    %601 = vmatprep.subr.mxu0 0.0
    %602 = vmatpush2.xpose.msra.mxu0 0.0
    %603 = vmatprep.subr.mxu0 0.0
    %604 = vmatpush2.xpose.msra.mxu0 0.0
    %605 = vmatprep.subr.mxu0 0.0
    %606 = vmatpush2.xpose.msra.mxu0 0.0
    %607 = vmatprep.subr.mxu0 0.0
    %608 = vmatpush2.xpose.msra.mxu0 0.0
    %609 = vmatprep.subr.mxu0 0.0
    %610 = vmatpush2.xpose.msra.mxu0 0.0
    %611 = vmatprep.subr.mxu0 0.0
    %612 = vmatpush2.xpose.msra.mxu0 0.0
    %613 = vmatprep.mubr.f32.mxu0 0.0
    %614 = vmatmul.mubr.f32.gmra.mxu0 %v545
    %v615 = vpop.f32.mrf.mxu0
    %v616 = vadd.f32 0.0, %v615
    %v617 = vpop.f32.mrf.mxu0
    %618 = vdwg.mxu0
    %v619 = vsel %vm206, %v616, -inf
    %620 = vmax.xlane.f32.xlu0 %v619
    %v621 = vpop.xlane.xlu0 %620
    %v622 = vsub.f32 %v616, %v621
    %v623 = vmul.f32 %v622, 1.442695
    %v624 = vpow.pop %v623
    %v625 = vsel %vm206, %v624, 0.0
    %626 = vadd.xlane.f32.xlu0 %v625
    %v627 = vpop.xlane.xlu0 %626
    %628 = vrot.lane.b32.xlu0 %v92, 48
    %v629 = vpop.permute.xlu0 %628
    %v632 = vsel %vm206, %v624, 0
    %634 = vmatprep.subr.mxu0 0.0
    %635 = vmatpush1.msra.mxu0 0.0
    %636 = vmatprep.subr.mxu0 0.0
    %637 = vmatpush1.msra.mxu0 0.0
    %638 = vmatprep.subr.mxu0 0.0
    %639 = vmatpush1.msra.mxu0 0.0
    %640 = vmatprep.subr.mxu0 0.0
    %641 = vmatpush1.msra.mxu0 0.0
    %642 = vmatprep.subr.mxu0 0.0
    %643 = vmatpush1.msra.mxu0 0.0
    %644 = vmatprep.subr.mxu0 0.0
    %645 = vmatpush1.msra.mxu0 0.0
    %646 = vmatprep.subr.mxu0 0.0
    %647 = vmatpush1.msra.mxu0 0.0
    %648 = vmatprep.subr.mxu0 0.0
    %649 = vmatpush1.msra.mxu0 0.0
    %650 = vmatprep.subr.mxu0 0.0
    %651 = vmatpush1.msra.mxu0 0.0
    %652 = vmatprep.subr.mxu0 0.0
    %653 = vmatpush1.msra.mxu0 0.0
    %654 = vmatprep.subr.mxu0 0.0
    %655 = vmatpush1.msra.mxu0 0.0
    %656 = vmatprep.subr.mxu0 0.0
    %657 = vmatpush1.msra.mxu0 0.0
    %658 = vmatprep.subr.mxu0 0.0
    %659 = vmatpush1.msra.mxu0 0.0
    %660 = vmatprep.subr.mxu0 0.0
    %661 = vmatpush1.msra.mxu0 0.0
    %662 = vmatprep.subr.mxu0 0.0
    %663 = vmatpush1.msra.mxu0 0.0
    %664 = vmatprep.subr.mxu0 0.0
    %665 = vmatpush1.msra.mxu0 %v629
    %666 = vmatprep.subr.mxu0 0.0
    %667 = vmatpush2.msra.mxu0 0.0
    %668 = vmatprep.subr.mxu0 0.0
    %669 = vmatpush2.msra.mxu0 0.0
    %670 = vmatprep.subr.mxu0 0.0
    %671 = vmatpush2.msra.mxu0 0.0
    %672 = vmatprep.subr.mxu0 0.0
    %673 = vmatpush2.msra.mxu0 0.0
    %674 = vmatprep.subr.mxu0 0.0
    %675 = vmatpush2.msra.mxu0 0.0
    %676 = vmatprep.subr.mxu0 0.0
    %677 = vmatpush2.msra.mxu0 0.0
    %678 = vmatprep.subr.mxu0 0.0
    %679 = vmatpush2.msra.mxu0 0.0
    %680 = vmatprep.subr.mxu0 0.0
    %681 = vmatpush2.msra.mxu0 0.0
    %682 = vmatprep.subr.mxu0 0.0
    %683 = vmatpush2.msra.mxu0 0.0
    %684 = vmatprep.subr.mxu0 0.0
    %685 = vmatpush2.msra.mxu0 0.0
    %686 = vmatprep.subr.mxu0 0.0
    %687 = vmatpush2.msra.mxu0 0.0
    %688 = vmatprep.subr.mxu0 0.0
    %689 = vmatpush2.msra.mxu0 0.0
    %690 = vmatprep.subr.mxu0 0.0
    %691 = vmatpush2.msra.mxu0 0.0
    %692 = vmatprep.subr.mxu0 0.0
    %693 = vmatpush2.msra.mxu0 0.0
    %694 = vmatprep.subr.mxu0 0.0
    %695 = vmatpush2.msra.mxu0 0.0
    %696 = vmatprep.subr.mxu0 0.0
    %697 = vmatpush2.msra.mxu0 0.0
    %698 = vmatprep.mubr.f32.mxu0 0.0
    %699 = vmatmul.mubr.f32.gmra.mxu0 %v632
    %v700 = vpop.f32.mrf.mxu0
    %v701 = vadd.f32 0.0, %v700
    %v702 = vpop.f32.mrf.mxu0
    %703 = vdwg.mxu0
    %v704 = vrcp.pop %v627
    %v705 = vmul.f32 %v701, %v704
    %707 = vrot.lane.b32.xlu0 %v705, 16
    %v708 = vpop.permute.xlu0 %707
    %vm710 = vcmask 195712
    %711 = vst.msk [vmem:[#allocation2] sm:$0xff] %vm710, %v708
    %712 = vrot.lane.b32.xlu0 %v155, 104
    %v713 = vpop.permute.xlu0 %712
    %714 = vrot.lane.b32.xlu0 %v201, 72
    %v715 = vpop.permute.xlu0 %714
    %v716 = vsel %vm206, %v713, 0
    %v718 = vsel %vm206, %v715, 0
    %720 = vmatprep.subr.mxu0 0.0
    %721 = vmatpush1.xpose.msra.mxu0 0.0
    %722 = vmatprep.subr.mxu0 0.0
    %723 = vmatpush1.xpose.msra.mxu0 0.0
    %724 = vmatprep.subr.mxu0 0.0
    %725 = vmatpush1.xpose.msra.mxu0 0.0
    %726 = vmatprep.subr.mxu0 0.0
    %727 = vmatpush1.xpose.msra.mxu0 0.0
    %728 = vmatprep.subr.mxu0 0.0
    %729 = vmatpush1.xpose.msra.mxu0 0.0
    %730 = vmatprep.subr.mxu0 0.0
    %731 = vmatpush1.xpose.msra.mxu0 0.0
    %732 = vmatprep.subr.mxu0 0.0
    %733 = vmatpush1.xpose.msra.mxu0 0.0
    %734 = vmatprep.subr.mxu0 0.0
    %735 = vmatpush1.xpose.msra.mxu0 0.0
    %736 = vmatprep.subr.mxu0 0.0
    %737 = vmatpush1.xpose.msra.mxu0 0.0
    %738 = vmatprep.subr.mxu0 0.0
    %739 = vmatpush1.xpose.msra.mxu0 0.0
    %740 = vmatprep.subr.mxu0 0.0
    %741 = vmatpush1.xpose.msra.mxu0 0.0
    %742 = vmatprep.subr.mxu0 0.0
    %743 = vmatpush1.xpose.msra.mxu0 0.0
    %744 = vmatprep.subr.mxu0 0.0
    %745 = vmatpush1.xpose.msra.mxu0 0.0
    %746 = vmatprep.subr.mxu0 0.0
    %747 = vmatpush1.xpose.msra.mxu0 0.0
    %748 = vmatprep.subr.mxu0 0.0
    %749 = vmatpush1.xpose.msra.mxu0 0.0
    %750 = vmatprep.subr.mxu0 0.0
    %751 = vmatpush1.xpose.msra.mxu0 %v718
    %752 = vmatprep.subr.mxu0 0.0
    %753 = vmatpush2.xpose.msra.mxu0 0.0
    %754 = vmatprep.subr.mxu0 0.0
    %755 = vmatpush2.xpose.msra.mxu0 0.0
    %756 = vmatprep.subr.mxu0 0.0
    %757 = vmatpush2.xpose.msra.mxu0 0.0
    %758 = vmatprep.subr.mxu0 0.0
    %759 = vmatpush2.xpose.msra.mxu0 0.0
    %760 = vmatprep.subr.mxu0 0.0
    %761 = vmatpush2.xpose.msra.mxu0 0.0
    %762 = vmatprep.subr.mxu0 0.0
    %763 = vmatpush2.xpose.msra.mxu0 0.0
    %764 = vmatprep.subr.mxu0 0.0
    %765 = vmatpush2.xpose.msra.mxu0 0.0
    %766 = vmatprep.subr.mxu0 0.0
    %767 = vmatpush2.xpose.msra.mxu0 0.0
    %768 = vmatprep.subr.mxu0 0.0
    %769 = vmatpush2.xpose.msra.mxu0 0.0
    %770 = vmatprep.subr.mxu0 0.0
    %771 = vmatpush2.xpose.msra.mxu0 0.0
    %772 = vmatprep.subr.mxu0 0.0
    %773 = vmatpush2.xpose.msra.mxu0 0.0
    %774 = vmatprep.subr.mxu0 0.0
    %775 = vmatpush2.xpose.msra.mxu0 0.0
    %776 = vmatprep.subr.mxu0 0.0
    %777 = vmatpush2.xpose.msra.mxu0 0.0
    %778 = vmatprep.subr.mxu0 0.0
    %779 = vmatpush2.xpose.msra.mxu0 0.0
    %780 = vmatprep.subr.mxu0 0.0
    %781 = vmatpush2.xpose.msra.mxu0 0.0
    %782 = vmatprep.subr.mxu0 0.0
    %783 = vmatpush2.xpose.msra.mxu0 0.0
    %784 = vmatprep.mubr.f32.mxu0 0.0
    %785 = vmatmul.mubr.f32.gmra.mxu0 %v716
    %v786 = vpop.f32.mrf.mxu0
    %v787 = vadd.f32 0.0, %v786
    %v788 = vpop.f32.mrf.mxu0
    %789 = vdwg.mxu0
    %v790 = vsel %vm206, %v787, -inf
    %791 = vmax.xlane.f32.xlu0 %v790
    %v792 = vpop.xlane.xlu0 %791
    %v793 = vsub.f32 %v787, %v792
    %v794 = vmul.f32 %v793, 1.442695
    %v795 = vpow.pop %v794
    %v796 = vsel %vm206, %v795, 0.0
    %797 = vadd.xlane.f32.xlu0 %v796
    %v798 = vpop.xlane.xlu0 %797
    %799 = vrot.lane.b32.xlu0 %v92, 40
    %v800 = vpop.permute.xlu0 %799
    %v803 = vsel %vm206, %v795, 0
    %805 = vmatprep.subr.mxu0 0.0
    %806 = vmatpush1.msra.mxu0 0.0
    %807 = vmatprep.subr.mxu0 0.0
    %808 = vmatpush1.msra.mxu0 0.0
    %809 = vmatprep.subr.mxu0 0.0
    %810 = vmatpush1.msra.mxu0 0.0
    %811 = vmatprep.subr.mxu0 0.0
    %812 = vmatpush1.msra.mxu0 0.0
    %813 = vmatprep.subr.mxu0 0.0
    %814 = vmatpush1.msra.mxu0 0.0
    %815 = vmatprep.subr.mxu0 0.0
    %816 = vmatpush1.msra.mxu0 0.0
    %817 = vmatprep.subr.mxu0 0.0
    %818 = vmatpush1.msra.mxu0 0.0
    %819 = vmatprep.subr.mxu0 0.0
    %820 = vmatpush1.msra.mxu0 0.0
    %821 = vmatprep.subr.mxu0 0.0
    %822 = vmatpush1.msra.mxu0 0.0
    %823 = vmatprep.subr.mxu0 0.0
    %824 = vmatpush1.msra.mxu0 0.0
    %825 = vmatprep.subr.mxu0 0.0
    %826 = vmatpush1.msra.mxu0 0.0
    %827 = vmatprep.subr.mxu0 0.0
    %828 = vmatpush1.msra.mxu0 0.0
    %829 = vmatprep.subr.mxu0 0.0
    %830 = vmatpush1.msra.mxu0 0.0
    %831 = vmatprep.subr.mxu0 0.0
    %832 = vmatpush1.msra.mxu0 0.0
    %833 = vmatprep.subr.mxu0 0.0
    %834 = vmatpush1.msra.mxu0 0.0
    %835 = vmatprep.subr.mxu0 0.0
    %836 = vmatpush1.msra.mxu0 %v800
    %837 = vmatprep.subr.mxu0 0.0
    %838 = vmatpush2.msra.mxu0 0.0
    %839 = vmatprep.subr.mxu0 0.0
    %840 = vmatpush2.msra.mxu0 0.0
    %841 = vmatprep.subr.mxu0 0.0
    %842 = vmatpush2.msra.mxu0 0.0
    %843 = vmatprep.subr.mxu0 0.0
    %844 = vmatpush2.msra.mxu0 0.0
    %845 = vmatprep.subr.mxu0 0.0
    %846 = vmatpush2.msra.mxu0 0.0
    %847 = vmatprep.subr.mxu0 0.0
    %848 = vmatpush2.msra.mxu0 0.0
    %849 = vmatprep.subr.mxu0 0.0
    %850 = vmatpush2.msra.mxu0 0.0
    %851 = vmatprep.subr.mxu0 0.0
    %852 = vmatpush2.msra.mxu0 0.0
    %853 = vmatprep.subr.mxu0 0.0
    %854 = vmatpush2.msra.mxu0 0.0
    %855 = vmatprep.subr.mxu0 0.0
    %856 = vmatpush2.msra.mxu0 0.0
    %857 = vmatprep.subr.mxu0 0.0
    %858 = vmatpush2.msra.mxu0 0.0
    %859 = vmatprep.subr.mxu0 0.0
    %860 = vmatpush2.msra.mxu0 0.0
    %861 = vmatprep.subr.mxu0 0.0
    %862 = vmatpush2.msra.mxu0 0.0
    %863 = vmatprep.subr.mxu0 0.0
    %864 = vmatpush2.msra.mxu0 0.0
    %865 = vmatprep.subr.mxu0 0.0
    %866 = vmatpush2.msra.mxu0 0.0
    %867 = vmatprep.subr.mxu0 0.0
    %868 = vmatpush2.msra.mxu0 0.0
    %869 = vmatprep.mubr.f32.mxu0 0.0
    %870 = vmatmul.mubr.f32.gmra.mxu0 %v803
    %v871 = vpop.f32.mrf.mxu0
    %v872 = vadd.f32 0.0, %v871
    %v873 = vpop.f32.mrf.mxu0
    %874 = vdwg.mxu0
    %v875 = vrcp.pop %v798
    %v876 = vmul.f32 %v872, %v875
    %878 = vrot.lane.b32.xlu0 %v876, 24
    %v879 = vpop.permute.xlu0 %878
    %vm881 = vcmask 261312
    %882 = vst.msk [vmem:[#allocation2] sm:$0xff] %vm881, %v879
    %884 = vrot.lane.b32.xlu0 %v202, 96
    %v885 = vpop.permute.xlu0 %884
    %v887 = vsel %vm206, %v156, 0
    %v889 = vsel %vm206, %v885, 0
    %891 = vmatprep.subr.mxu0 0.0
    %892 = vmatpush1.xpose.msra.mxu0 0.0
    %893 = vmatprep.subr.mxu0 0.0
    %894 = vmatpush1.xpose.msra.mxu0 0.0
    %895 = vmatprep.subr.mxu0 0.0
    %896 = vmatpush1.xpose.msra.mxu0 0.0
    %897 = vmatprep.subr.mxu0 0.0
    %898 = vmatpush1.xpose.msra.mxu0 0.0
    %899 = vmatprep.subr.mxu0 0.0
    %900 = vmatpush1.xpose.msra.mxu0 0.0
    %901 = vmatprep.subr.mxu0 0.0
    %902 = vmatpush1.xpose.msra.mxu0 0.0
    %903 = vmatprep.subr.mxu0 0.0
    %904 = vmatpush1.xpose.msra.mxu0 0.0
    %905 = vmatprep.subr.mxu0 0.0
    %906 = vmatpush1.xpose.msra.mxu0 0.0
    %907 = vmatprep.subr.mxu0 0.0
    %908 = vmatpush1.xpose.msra.mxu0 0.0
    %909 = vmatprep.subr.mxu0 0.0
    %910 = vmatpush1.xpose.msra.mxu0 0.0
    %911 = vmatprep.subr.mxu0 0.0
    %912 = vmatpush1.xpose.msra.mxu0 0.0
    %913 = vmatprep.subr.mxu0 0.0
    %914 = vmatpush1.xpose.msra.mxu0 0.0
    %915 = vmatprep.subr.mxu0 0.0
    %916 = vmatpush1.xpose.msra.mxu0 0.0
    %917 = vmatprep.subr.mxu0 0.0
    %918 = vmatpush1.xpose.msra.mxu0 0.0
    %919 = vmatprep.subr.mxu0 0.0
    %920 = vmatpush1.xpose.msra.mxu0 0.0
    %921 = vmatprep.subr.mxu0 0.0
    %922 = vmatpush1.xpose.msra.mxu0 %v889
    %923 = vmatprep.subr.mxu0 0.0
    %924 = vmatpush2.xpose.msra.mxu0 0.0
    %925 = vmatprep.subr.mxu0 0.0
    %926 = vmatpush2.xpose.msra.mxu0 0.0
    %927 = vmatprep.subr.mxu0 0.0
    %928 = vmatpush2.xpose.msra.mxu0 0.0
    %929 = vmatprep.subr.mxu0 0.0
    %930 = vmatpush2.xpose.msra.mxu0 0.0
    %931 = vmatprep.subr.mxu0 0.0
    %932 = vmatpush2.xpose.msra.mxu0 0.0
    %933 = vmatprep.subr.mxu0 0.0
    %934 = vmatpush2.xpose.msra.mxu0 0.0
    %935 = vmatprep.subr.mxu0 0.0
    %936 = vmatpush2.xpose.msra.mxu0 0.0
    %937 = vmatprep.subr.mxu0 0.0
    %938 = vmatpush2.xpose.msra.mxu0 0.0
    %939 = vmatprep.subr.mxu0 0.0
    %940 = vmatpush2.xpose.msra.mxu0 0.0
    %941 = vmatprep.subr.mxu0 0.0
    %942 = vmatpush2.xpose.msra.mxu0 0.0
    %943 = vmatprep.subr.mxu0 0.0
    %944 = vmatpush2.xpose.msra.mxu0 0.0
    %945 = vmatprep.subr.mxu0 0.0
    %946 = vmatpush2.xpose.msra.mxu0 0.0
    %947 = vmatprep.subr.mxu0 0.0
    %948 = vmatpush2.xpose.msra.mxu0 0.0
    %949 = vmatprep.subr.mxu0 0.0
    %950 = vmatpush2.xpose.msra.mxu0 0.0
    %951 = vmatprep.subr.mxu0 0.0
    %952 = vmatpush2.xpose.msra.mxu0 0.0
    %953 = vmatprep.subr.mxu0 0.0
    %954 = vmatpush2.xpose.msra.mxu0 0.0
    %955 = vmatprep.mubr.f32.mxu0 0.0
    %956 = vmatmul.mubr.f32.gmra.mxu0 %v887
    %v957 = vpop.f32.mrf.mxu0
    %v958 = vadd.f32 0.0, %v957
    %v959 = vpop.f32.mrf.mxu0
    %960 = vdwg.mxu0
    %v961 = vsel %vm206, %v958, -inf
    %962 = vmax.xlane.f32.xlu0 %v961
    %v963 = vpop.xlane.xlu0 %962
    %v964 = vsub.f32 %v958, %v963
    %v965 = vmul.f32 %v964, 1.442695
    %v966 = vpow.pop %v965
    %v967 = vsel %vm206, %v966, 0.0
    %968 = vadd.xlane.f32.xlu0 %v967
    %v969 = vpop.xlane.xlu0 %968
    %970 = vrot.lane.b32.xlu0 %v97, 64
    %v971 = vpop.permute.xlu0 %970
    %v974 = vsel %vm206, %v966, 0
    %976 = vmatprep.subr.mxu0 0.0
    %977 = vmatpush1.msra.mxu0 0.0
    %978 = vmatprep.subr.mxu0 0.0
    %979 = vmatpush1.msra.mxu0 0.0
    %980 = vmatprep.subr.mxu0 0.0
    %981 = vmatpush1.msra.mxu0 0.0
    %982 = vmatprep.subr.mxu0 0.0
    %983 = vmatpush1.msra.mxu0 0.0
    %984 = vmatprep.subr.mxu0 0.0
    %985 = vmatpush1.msra.mxu0 0.0
    %986 = vmatprep.subr.mxu0 0.0
    %987 = vmatpush1.msra.mxu0 0.0
    %988 = vmatprep.subr.mxu0 0.0
    %989 = vmatpush1.msra.mxu0 0.0
    %990 = vmatprep.subr.mxu0 0.0
    %991 = vmatpush1.msra.mxu0 0.0
    %992 = vmatprep.subr.mxu0 0.0
    %993 = vmatpush1.msra.mxu0 0.0
    %994 = vmatprep.subr.mxu0 0.0
    %995 = vmatpush1.msra.mxu0 0.0
    %996 = vmatprep.subr.mxu0 0.0
    %997 = vmatpush1.msra.mxu0 0.0
    %998 = vmatprep.subr.mxu0 0.0
    %999 = vmatpush1.msra.mxu0 0.0
    %1000 = vmatprep.subr.mxu0 0.0
    %1001 = vmatpush1.msra.mxu0 0.0
    %1002 = vmatprep.subr.mxu0 0.0
    %1003 = vmatpush1.msra.mxu0 0.0
    %1004 = vmatprep.subr.mxu0 0.0
    %1005 = vmatpush1.msra.mxu0 0.0
    %1006 = vmatprep.subr.mxu0 0.0
    %1007 = vmatpush1.msra.mxu0 %v971
    %1008 = vmatprep.subr.mxu0 0.0
    %1009 = vmatpush2.msra.mxu0 0.0
    %1010 = vmatprep.subr.mxu0 0.0
    %1011 = vmatpush2.msra.mxu0 0.0
    %1012 = vmatprep.subr.mxu0 0.0
    %1013 = vmatpush2.msra.mxu0 0.0
    %1014 = vmatprep.subr.mxu0 0.0
    %1015 = vmatpush2.msra.mxu0 0.0
    %1016 = vmatprep.subr.mxu0 0.0
    %1017 = vmatpush2.msra.mxu0 0.0
    %1018 = vmatprep.subr.mxu0 0.0
    %1019 = vmatpush2.msra.mxu0 0.0
    %1020 = vmatprep.subr.mxu0 0.0
    %1021 = vmatpush2.msra.mxu0 0.0
    %1022 = vmatprep.subr.mxu0 0.0
    %1023 = vmatpush2.msra.mxu0 0.0
    %1024 = vmatprep.subr.mxu0 0.0
    %1025 = vmatpush2.msra.mxu0 0.0
    %1026 = vmatprep.subr.mxu0 0.0
    %1027 = vmatpush2.msra.mxu0 0.0
    %1028 = vmatprep.subr.mxu0 0.0
    %1029 = vmatpush2.msra.mxu0 0.0
    %1030 = vmatprep.subr.mxu0 0.0
    %1031 = vmatpush2.msra.mxu0 0.0
    %1032 = vmatprep.subr.mxu0 0.0
    %1033 = vmatpush2.msra.mxu0 0.0
    %1034 = vmatprep.subr.mxu0 0.0
    %1035 = vmatpush2.msra.mxu0 0.0
    %1036 = vmatprep.subr.mxu0 0.0
    %1037 = vmatpush2.msra.mxu0 0.0
    %1038 = vmatprep.subr.mxu0 0.0
    %1039 = vmatpush2.msra.mxu0 0.0
    %1040 = vmatprep.mubr.f32.mxu0 0.0
    %1041 = vmatmul.mubr.f32.gmra.mxu0 %v974
    %v1042 = vpop.f32.mrf.mxu0
    %v1043 = vadd.f32 0.0, %v1042
    %v1044 = vpop.f32.mrf.mxu0
    %1045 = vdwg.mxu0
    %v1046 = vrcp.pop %v969
    %v1047 = vmul.f32 %v1043, %v1046
    %1048 = vst.msk [vmem:[#allocation2 + $0x8] sm:$0xff] %vm206, %v1047
    %1049 = vrot.lane.b32.xlu0 %v156, 120
    %v1050 = vpop.permute.xlu0 %1049
    %1051 = vrot.lane.b32.xlu0 %v202, 88
    %v1052 = vpop.permute.xlu0 %1051
    %v1053 = vsel %vm206, %v1050, 0
    %v1055 = vsel %vm206, %v1052, 0
    %1057 = vmatprep.subr.mxu0 0.0
    %1058 = vmatpush1.xpose.msra.mxu0 0.0
    %1059 = vmatprep.subr.mxu0 0.0
    %1060 = vmatpush1.xpose.msra.mxu0 0.0
    %1061 = vmatprep.subr.mxu0 0.0
    %1062 = vmatpush1.xpose.msra.mxu0 0.0
    %1063 = vmatprep.subr.mxu0 0.0
    %1064 = vmatpush1.xpose.msra.mxu0 0.0
    %1065 = vmatprep.subr.mxu0 0.0
    %1066 = vmatpush1.xpose.msra.mxu0 0.0
    %1067 = vmatprep.subr.mxu0 0.0
    %1068 = vmatpush1.xpose.msra.mxu0 0.0
    %1069 = vmatprep.subr.mxu0 0.0
    %1070 = vmatpush1.xpose.msra.mxu0 0.0
    %1071 = vmatprep.subr.mxu0 0.0
    %1072 = vmatpush1.xpose.msra.mxu0 0.0
    %1073 = vmatprep.subr.mxu0 0.0
    %1074 = vmatpush1.xpose.msra.mxu0 0.0
    %1075 = vmatprep.subr.mxu0 0.0
    %1076 = vmatpush1.xpose.msra.mxu0 0.0
    %1077 = vmatprep.subr.mxu0 0.0
    %1078 = vmatpush1.xpose.msra.mxu0 0.0
    %1079 = vmatprep.subr.mxu0 0.0
    %1080 = vmatpush1.xpose.msra.mxu0 0.0
    %1081 = vmatprep.subr.mxu0 0.0
    %1082 = vmatpush1.xpose.msra.mxu0 0.0
    %1083 = vmatprep.subr.mxu0 0.0
    %1084 = vmatpush1.xpose.msra.mxu0 0.0
    %1085 = vmatprep.subr.mxu0 0.0
    %1086 = vmatpush1.xpose.msra.mxu0 0.0
    %1087 = vmatprep.subr.mxu0 0.0
    %1088 = vmatpush1.xpose.msra.mxu0 %v1055
    %1089 = vmatprep.subr.mxu0 0.0
    %1090 = vmatpush2.xpose.msra.mxu0 0.0
    %1091 = vmatprep.subr.mxu0 0.0
    %1092 = vmatpush2.xpose.msra.mxu0 0.0
    %1093 = vmatprep.subr.mxu0 0.0
    %1094 = vmatpush2.xpose.msra.mxu0 0.0
    %1095 = vmatprep.subr.mxu0 0.0
    %1096 = vmatpush2.xpose.msra.mxu0 0.0
    %1097 = vmatprep.subr.mxu0 0.0
    %1098 = vmatpush2.xpose.msra.mxu0 0.0
    %1099 = vmatprep.subr.mxu0 0.0
    %1100 = vmatpush2.xpose.msra.mxu0 0.0
    %1101 = vmatprep.subr.mxu0 0.0
    %1102 = vmatpush2.xpose.msra.mxu0 0.0
    %1103 = vmatprep.subr.mxu0 0.0
    %1104 = vmatpush2.xpose.msra.mxu0 0.0
    %1105 = vmatprep.subr.mxu0 0.0
    %1106 = vmatpush2.xpose.msra.mxu0 0.0
    %1107 = vmatprep.subr.mxu0 0.0
    %1108 = vmatpush2.xpose.msra.mxu0 0.0
    %1109 = vmatprep.subr.mxu0 0.0
    %1110 = vmatpush2.xpose.msra.mxu0 0.0
    %1111 = vmatprep.subr.mxu0 0.0
    %1112 = vmatpush2.xpose.msra.mxu0 0.0
    %1113 = vmatprep.subr.mxu0 0.0
    %1114 = vmatpush2.xpose.msra.mxu0 0.0
    %1115 = vmatprep.subr.mxu0 0.0
    %1116 = vmatpush2.xpose.msra.mxu0 0.0
    %1117 = vmatprep.subr.mxu0 0.0
    %1118 = vmatpush2.xpose.msra.mxu0 0.0
    %1119 = vmatprep.subr.mxu0 0.0
    %1120 = vmatpush2.xpose.msra.mxu0 0.0
    %1121 = vmatprep.mubr.f32.mxu0 0.0
    %1122 = vmatmul.mubr.f32.gmra.mxu0 %v1053
    %v1123 = vpop.f32.mrf.mxu0
    %v1124 = vadd.f32 0.0, %v1123
    %v1125 = vpop.f32.mrf.mxu0
    %1126 = vdwg.mxu0
    %v1127 = vsel %vm206, %v1124, -inf
    %1128 = vmax.xlane.f32.xlu0 %v1127
    %v1129 = vpop.xlane.xlu0 %1128
    %v1130 = vsub.f32 %v1124, %v1129
    %v1131 = vmul.f32 %v1130, 1.442695
    %v1132 = vpow.pop %v1131
    %v1133 = vsel %vm206, %v1132, 0.0
    %1134 = vadd.xlane.f32.xlu0 %v1133
    %v1135 = vpop.xlane.xlu0 %1134
    %1136 = vrot.lane.b32.xlu0 %v97, 56
    %v1137 = vpop.permute.xlu0 %1136
    %v1140 = vsel %vm206, %v1132, 0
    %1142 = vmatprep.subr.mxu0 0.0
    %1143 = vmatpush1.msra.mxu0 0.0
    %1144 = vmatprep.subr.mxu0 0.0
    %1145 = vmatpush1.msra.mxu0 0.0
    %1146 = vmatprep.subr.mxu0 0.0
    %1147 = vmatpush1.msra.mxu0 0.0
    %1148 = vmatprep.subr.mxu0 0.0
    %1149 = vmatpush1.msra.mxu0 0.0
    %1150 = vmatprep.subr.mxu0 0.0
    %1151 = vmatpush1.msra.mxu0 0.0
    %1152 = vmatprep.subr.mxu0 0.0
    %1153 = vmatpush1.msra.mxu0 0.0
    %1154 = vmatprep.subr.mxu0 0.0
    %1155 = vmatpush1.msra.mxu0 0.0
    %1156 = vmatprep.subr.mxu0 0.0
    %1157 = vmatpush1.msra.mxu0 0.0
    %1158 = vmatprep.subr.mxu0 0.0
    %1159 = vmatpush1.msra.mxu0 0.0
    %1160 = vmatprep.subr.mxu0 0.0
    %1161 = vmatpush1.msra.mxu0 0.0
    %1162 = vmatprep.subr.mxu0 0.0
    %1163 = vmatpush1.msra.mxu0 0.0
    %1164 = vmatprep.subr.mxu0 0.0
    %1165 = vmatpush1.msra.mxu0 0.0
    %1166 = vmatprep.subr.mxu0 0.0
    %1167 = vmatpush1.msra.mxu0 0.0
    %1168 = vmatprep.subr.mxu0 0.0
    %1169 = vmatpush1.msra.mxu0 0.0
    %1170 = vmatprep.subr.mxu0 0.0
    %1171 = vmatpush1.msra.mxu0 0.0
    %1172 = vmatprep.subr.mxu0 0.0
    %1173 = vmatpush1.msra.mxu0 %v1137
    %1174 = vmatprep.subr.mxu0 0.0
    %1175 = vmatpush2.msra.mxu0 0.0
    %1176 = vmatprep.subr.mxu0 0.0
    %1177 = vmatpush2.msra.mxu0 0.0
    %1178 = vmatprep.subr.mxu0 0.0
    %1179 = vmatpush2.msra.mxu0 0.0
    %1180 = vmatprep.subr.mxu0 0.0
    %1181 = vmatpush2.msra.mxu0 0.0
    %1182 = vmatprep.subr.mxu0 0.0
    %1183 = vmatpush2.msra.mxu0 0.0
    %1184 = vmatprep.subr.mxu0 0.0
    %1185 = vmatpush2.msra.mxu0 0.0
    %1186 = vmatprep.subr.mxu0 0.0
    %1187 = vmatpush2.msra.mxu0 0.0
    %1188 = vmatprep.subr.mxu0 0.0
    %1189 = vmatpush2.msra.mxu0 0.0
    %1190 = vmatprep.subr.mxu0 0.0
    %1191 = vmatpush2.msra.mxu0 0.0
    %1192 = vmatprep.subr.mxu0 0.0
    %1193 = vmatpush2.msra.mxu0 0.0
    %1194 = vmatprep.subr.mxu0 0.0
    %1195 = vmatpush2.msra.mxu0 0.0
    %1196 = vmatprep.subr.mxu0 0.0
    %1197 = vmatpush2.msra.mxu0 0.0
    %1198 = vmatprep.subr.mxu0 0.0
    %1199 = vmatpush2.msra.mxu0 0.0
    %1200 = vmatprep.subr.mxu0 0.0
    %1201 = vmatpush2.msra.mxu0 0.0
    %1202 = vmatprep.subr.mxu0 0.0
    %1203 = vmatpush2.msra.mxu0 0.0
    %1204 = vmatprep.subr.mxu0 0.0
    %1205 = vmatpush2.msra.mxu0 0.0
    %1206 = vmatprep.mubr.f32.mxu0 0.0
    %1207 = vmatmul.mubr.f32.gmra.mxu0 %v1140
    %v1208 = vpop.f32.mrf.mxu0
    %v1209 = vadd.f32 0.0, %v1208
    %v1210 = vpop.f32.mrf.mxu0
    %1211 = vdwg.mxu0
    %v1212 = vrcp.pop %v1135
    %v1213 = vmul.f32 %v1209, %v1212
    %1215 = vrot.lane.b32.xlu0 %v1213, 8
    %v1216 = vpop.permute.xlu0 %1215
    %1218 = vst.msk [vmem:[#allocation2 + $0x8] sm:$0xff] %vm539, %v1216
    %1219 = vrot.lane.b32.xlu0 %v156, 112
    %v1220 = vpop.permute.xlu0 %1219
    %1221 = vrot.lane.b32.xlu0 %v202, 80
    %v1222 = vpop.permute.xlu0 %1221
    %v1223 = vsel %vm206, %v1220, 0
    %v1225 = vsel %vm206, %v1222, 0
    %1227 = vmatprep.subr.mxu0 0.0
    %1228 = vmatpush1.xpose.msra.mxu0 0.0
    %1229 = vmatprep.subr.mxu0 0.0
    %1230 = vmatpush1.xpose.msra.mxu0 0.0
    %1231 = vmatprep.subr.mxu0 0.0
    %1232 = vmatpush1.xpose.msra.mxu0 0.0
    %1233 = vmatprep.subr.mxu0 0.0
    %1234 = vmatpush1.xpose.msra.mxu0 0.0
    %1235 = vmatprep.subr.mxu0 0.0
    %1236 = vmatpush1.xpose.msra.mxu0 0.0
    %1237 = vmatprep.subr.mxu0 0.0
    %1238 = vmatpush1.xpose.msra.mxu0 0.0
    %1239 = vmatprep.subr.mxu0 0.0
    %1240 = vmatpush1.xpose.msra.mxu0 0.0
    %1241 = vmatprep.subr.mxu0 0.0
    %1242 = vmatpush1.xpose.msra.mxu0 0.0
    %1243 = vmatprep.subr.mxu0 0.0
    %1244 = vmatpush1.xpose.msra.mxu0 0.0
    %1245 = vmatprep.subr.mxu0 0.0
    %1246 = vmatpush1.xpose.msra.mxu0 0.0
    %1247 = vmatprep.subr.mxu0 0.0
    %1248 = vmatpush1.xpose.msra.mxu0 0.0
    %1249 = vmatprep.subr.mxu0 0.0
    %1250 = vmatpush1.xpose.msra.mxu0 0.0
    %1251 = vmatprep.subr.mxu0 0.0
    %1252 = vmatpush1.xpose.msra.mxu0 0.0
    %1253 = vmatprep.subr.mxu0 0.0
    %1254 = vmatpush1.xpose.msra.mxu0 0.0
    %1255 = vmatprep.subr.mxu0 0.0
    %1256 = vmatpush1.xpose.msra.mxu0 0.0
    %1257 = vmatprep.subr.mxu0 0.0
    %1258 = vmatpush1.xpose.msra.mxu0 %v1225
    %1259 = vmatprep.subr.mxu0 0.0
    %1260 = vmatpush2.xpose.msra.mxu0 0.0
    %1261 = vmatprep.subr.mxu0 0.0
    %1262 = vmatpush2.xpose.msra.mxu0 0.0
    %1263 = vmatprep.subr.mxu0 0.0
    %1264 = vmatpush2.xpose.msra.mxu0 0.0
    %1265 = vmatprep.subr.mxu0 0.0
    %1266 = vmatpush2.xpose.msra.mxu0 0.0
    %1267 = vmatprep.subr.mxu0 0.0
    %1268 = vmatpush2.xpose.msra.mxu0 0.0
    %1269 = vmatprep.subr.mxu0 0.0
    %1270 = vmatpush2.xpose.msra.mxu0 0.0
    %1271 = vmatprep.subr.mxu0 0.0
    %1272 = vmatpush2.xpose.msra.mxu0 0.0
    %1273 = vmatprep.subr.mxu0 0.0
    %1274 = vmatpush2.xpose.msra.mxu0 0.0
    %1275 = vmatprep.subr.mxu0 0.0
    %1276 = vmatpush2.xpose.msra.mxu0 0.0
    %1277 = vmatprep.subr.mxu0 0.0
    %1278 = vmatpush2.xpose.msra.mxu0 0.0
    %1279 = vmatprep.subr.mxu0 0.0
    %1280 = vmatpush2.xpose.msra.mxu0 0.0
    %1281 = vmatprep.subr.mxu0 0.0
    %1282 = vmatpush2.xpose.msra.mxu0 0.0
    %1283 = vmatprep.subr.mxu0 0.0
    %1284 = vmatpush2.xpose.msra.mxu0 0.0
    %1285 = vmatprep.subr.mxu0 0.0
    %1286 = vmatpush2.xpose.msra.mxu0 0.0
    %1287 = vmatprep.subr.mxu0 0.0
    %1288 = vmatpush2.xpose.msra.mxu0 0.0
    %1289 = vmatprep.subr.mxu0 0.0
    %1290 = vmatpush2.xpose.msra.mxu0 0.0
    %1291 = vmatprep.mubr.f32.mxu0 0.0
    %1292 = vmatmul.mubr.f32.gmra.mxu0 %v1223
    %v1293 = vpop.f32.mrf.mxu0
    %v1294 = vadd.f32 0.0, %v1293
    %v1295 = vpop.f32.mrf.mxu0
    %1296 = vdwg.mxu0
    %v1297 = vsel %vm206, %v1294, -inf
    %1298 = vmax.xlane.f32.xlu0 %v1297
    %v1299 = vpop.xlane.xlu0 %1298
    %v1300 = vsub.f32 %v1294, %v1299
    %v1301 = vmul.f32 %v1300, 1.442695
    %v1302 = vpow.pop %v1301
    %v1303 = vsel %vm206, %v1302, 0.0
    %1304 = vadd.xlane.f32.xlu0 %v1303
    %v1305 = vpop.xlane.xlu0 %1304
    %1306 = vrot.lane.b32.xlu0 %v97, 48
    %v1307 = vpop.permute.xlu0 %1306
    %v1310 = vsel %vm206, %v1302, 0
    %1312 = vmatprep.subr.mxu0 0.0
    %1313 = vmatpush1.msra.mxu0 0.0
    %1314 = vmatprep.subr.mxu0 0.0
    %1315 = vmatpush1.msra.mxu0 0.0
    %1316 = vmatprep.subr.mxu0 0.0
    %1317 = vmatpush1.msra.mxu0 0.0
    %1318 = vmatprep.subr.mxu0 0.0
    %1319 = vmatpush1.msra.mxu0 0.0
    %1320 = vmatprep.subr.mxu0 0.0
    %1321 = vmatpush1.msra.mxu0 0.0
    %1322 = vmatprep.subr.mxu0 0.0
    %1323 = vmatpush1.msra.mxu0 0.0
    %1324 = vmatprep.subr.mxu0 0.0
    %1325 = vmatpush1.msra.mxu0 0.0
    %1326 = vmatprep.subr.mxu0 0.0
    %1327 = vmatpush1.msra.mxu0 0.0
    %1328 = vmatprep.subr.mxu0 0.0
    %1329 = vmatpush1.msra.mxu0 0.0
    %1330 = vmatprep.subr.mxu0 0.0
    %1331 = vmatpush1.msra.mxu0 0.0
    %1332 = vmatprep.subr.mxu0 0.0
    %1333 = vmatpush1.msra.mxu0 0.0
    %1334 = vmatprep.subr.mxu0 0.0
    %1335 = vmatpush1.msra.mxu0 0.0
    %1336 = vmatprep.subr.mxu0 0.0
    %1337 = vmatpush1.msra.mxu0 0.0
    %1338 = vmatprep.subr.mxu0 0.0
    %1339 = vmatpush1.msra.mxu0 0.0
    %1340 = vmatprep.subr.mxu0 0.0
    %1341 = vmatpush1.msra.mxu0 0.0
    %1342 = vmatprep.subr.mxu0 0.0
    %1343 = vmatpush1.msra.mxu0 %v1307
    %1344 = vmatprep.subr.mxu0 0.0
    %1345 = vmatpush2.msra.mxu0 0.0
    %1346 = vmatprep.subr.mxu0 0.0
    %1347 = vmatpush2.msra.mxu0 0.0
    %1348 = vmatprep.subr.mxu0 0.0
    %1349 = vmatpush2.msra.mxu0 0.0
    %1350 = vmatprep.subr.mxu0 0.0
    %1351 = vmatpush2.msra.mxu0 0.0
    %1352 = vmatprep.subr.mxu0 0.0
    %1353 = vmatpush2.msra.mxu0 0.0
    %1354 = vmatprep.subr.mxu0 0.0
    %1355 = vmatpush2.msra.mxu0 0.0
    %1356 = vmatprep.subr.mxu0 0.0
    %1357 = vmatpush2.msra.mxu0 0.0
    %1358 = vmatprep.subr.mxu0 0.0
    %1359 = vmatpush2.msra.mxu0 0.0
    %1360 = vmatprep.subr.mxu0 0.0
    %1361 = vmatpush2.msra.mxu0 0.0
    %1362 = vmatprep.subr.mxu0 0.0
    %1363 = vmatpush2.msra.mxu0 0.0
    %1364 = vmatprep.subr.mxu0 0.0
    %1365 = vmatpush2.msra.mxu0 0.0
    %1366 = vmatprep.subr.mxu0 0.0
    %1367 = vmatpush2.msra.mxu0 0.0
    %1368 = vmatprep.subr.mxu0 0.0
    %1369 = vmatpush2.msra.mxu0 0.0
    %1370 = vmatprep.subr.mxu0 0.0
    %1371 = vmatpush2.msra.mxu0 0.0
    %1372 = vmatprep.subr.mxu0 0.0
    %1373 = vmatpush2.msra.mxu0 0.0
    %1374 = vmatprep.subr.mxu0 0.0
    %1375 = vmatpush2.msra.mxu0 0.0
    %1376 = vmatprep.mubr.f32.mxu0 0.0
    %1377 = vmatmul.mubr.f32.gmra.mxu0 %v1310
    %v1378 = vpop.f32.mrf.mxu0
    %v1379 = vadd.f32 0.0, %v1378
    %v1380 = vpop.f32.mrf.mxu0
    %1381 = vdwg.mxu0
    %v1382 = vrcp.pop %v1305
    %v1383 = vmul.f32 %v1379, %v1382
    %1385 = vrot.lane.b32.xlu0 %v1383, 16
    %v1386 = vpop.permute.xlu0 %1385
    %1388 = vst.msk [vmem:[#allocation2 + $0x8] sm:$0xff] %vm710, %v1386
    %1389 = vrot.lane.b32.xlu0 %v156, 104
    %v1390 = vpop.permute.xlu0 %1389
    %1391 = vrot.lane.b32.xlu0 %v202, 72
    %v1392 = vpop.permute.xlu0 %1391
    %v1393 = vsel %vm206, %v1390, 0
    %v1395 = vsel %vm206, %v1392, 0
    %1397 = vmatprep.subr.mxu0 0.0
    %1398 = vmatpush1.xpose.msra.mxu0 0.0
    %1399 = vmatprep.subr.mxu0 0.0
    %1400 = vmatpush1.xpose.msra.mxu0 0.0
    %1401 = vmatprep.subr.mxu0 0.0
    %1402 = vmatpush1.xpose.msra.mxu0 0.0
    %1403 = vmatprep.subr.mxu0 0.0
    %1404 = vmatpush1.xpose.msra.mxu0 0.0
    %1405 = vmatprep.subr.mxu0 0.0
    %1406 = vmatpush1.xpose.msra.mxu0 0.0
    %1407 = vmatprep.subr.mxu0 0.0
    %1408 = vmatpush1.xpose.msra.mxu0 0.0
    %1409 = vmatprep.subr.mxu0 0.0
    %1410 = vmatpush1.xpose.msra.mxu0 0.0
    %1411 = vmatprep.subr.mxu0 0.0
    %1412 = vmatpush1.xpose.msra.mxu0 0.0
    %1413 = vmatprep.subr.mxu0 0.0
    %1414 = vmatpush1.xpose.msra.mxu0 0.0
    %1415 = vmatprep.subr.mxu0 0.0
    %1416 = vmatpush1.xpose.msra.mxu0 0.0
    %1417 = vmatprep.subr.mxu0 0.0
    %1418 = vmatpush1.xpose.msra.mxu0 0.0
    %1419 = vmatprep.subr.mxu0 0.0
    %1420 = vmatpush1.xpose.msra.mxu0 0.0
    %1421 = vmatprep.subr.mxu0 0.0
    %1422 = vmatpush1.xpose.msra.mxu0 0.0
    %1423 = vmatprep.subr.mxu0 0.0
    %1424 = vmatpush1.xpose.msra.mxu0 0.0
    %1425 = vmatprep.subr.mxu0 0.0
    %1426 = vmatpush1.xpose.msra.mxu0 0.0
    %1427 = vmatprep.subr.mxu0 0.0
    %1428 = vmatpush1.xpose.msra.mxu0 %v1395
    %1429 = vmatprep.subr.mxu0 0.0
    %1430 = vmatpush2.xpose.msra.mxu0 0.0
    %1431 = vmatprep.subr.mxu0 0.0
    %1432 = vmatpush2.xpose.msra.mxu0 0.0
    %1433 = vmatprep.subr.mxu0 0.0
    %1434 = vmatpush2.xpose.msra.mxu0 0.0
    %1435 = vmatprep.subr.mxu0 0.0
    %1436 = vmatpush2.xpose.msra.mxu0 0.0
    %1437 = vmatprep.subr.mxu0 0.0
    %1438 = vmatpush2.xpose.msra.mxu0 0.0
    %1439 = vmatprep.subr.mxu0 0.0
    %1440 = vmatpush2.xpose.msra.mxu0 0.0
    %1441 = vmatprep.subr.mxu0 0.0
    %1442 = vmatpush2.xpose.msra.mxu0 0.0
    %1443 = vmatprep.subr.mxu0 0.0
    %1444 = vmatpush2.xpose.msra.mxu0 0.0
    %1445 = vmatprep.subr.mxu0 0.0
    %1446 = vmatpush2.xpose.msra.mxu0 0.0
    %1447 = vmatprep.subr.mxu0 0.0
    %1448 = vmatpush2.xpose.msra.mxu0 0.0
    %1449 = vmatprep.subr.mxu0 0.0
    %1450 = vmatpush2.xpose.msra.mxu0 0.0
    %1451 = vmatprep.subr.mxu0 0.0
    %1452 = vmatpush2.xpose.msra.mxu0 0.0
    %1453 = vmatprep.subr.mxu0 0.0
    %1454 = vmatpush2.xpose.msra.mxu0 0.0
    %1455 = vmatprep.subr.mxu0 0.0
    %1456 = vmatpush2.xpose.msra.mxu0 0.0
    %1457 = vmatprep.subr.mxu0 0.0
    %1458 = vmatpush2.xpose.msra.mxu0 0.0
    %1459 = vmatprep.subr.mxu0 0.0
    %1460 = vmatpush2.xpose.msra.mxu0 0.0
    %1461 = vmatprep.mubr.f32.mxu0 0.0
    %1462 = vmatmul.mubr.f32.gmra.mxu0 %v1393
    %v1463 = vpop.f32.mrf.mxu0
    %v1464 = vadd.f32 0.0, %v1463
    %v1465 = vpop.f32.mrf.mxu0
    %1466 = vdwg.mxu0
    %v1467 = vsel %vm206, %v1464, -inf
    %1468 = vmax.xlane.f32.xlu0 %v1467
    %v1469 = vpop.xlane.xlu0 %1468
    %v1470 = vsub.f32 %v1464, %v1469
    %v1471 = vmul.f32 %v1470, 1.442695
    %v1472 = vpow.pop %v1471
    %v1473 = vsel %vm206, %v1472, 0.0
    %1474 = vadd.xlane.f32.xlu0 %v1473
    %v1475 = vpop.xlane.xlu0 %1474
    %1476 = vrot.lane.b32.xlu0 %v97, 40
    %v1477 = vpop.permute.xlu0 %1476
    %v1480 = vsel %vm206, %v1472, 0
    %1482 = vmatprep.subr.mxu0 0.0
    %1483 = vmatpush1.msra.mxu0 0.0
    %1484 = vmatprep.subr.mxu0 0.0
    %1485 = vmatpush1.msra.mxu0 0.0
    %1486 = vmatprep.subr.mxu0 0.0
    %1487 = vmatpush1.msra.mxu0 0.0
    %1488 = vmatprep.subr.mxu0 0.0
    %1489 = vmatpush1.msra.mxu0 0.0
    %1490 = vmatprep.subr.mxu0 0.0
    %1491 = vmatpush1.msra.mxu0 0.0
    %1492 = vmatprep.subr.mxu0 0.0
    %1493 = vmatpush1.msra.mxu0 0.0
    %1494 = vmatprep.subr.mxu0 0.0
    %1495 = vmatpush1.msra.mxu0 0.0
    %1496 = vmatprep.subr.mxu0 0.0
    %1497 = vmatpush1.msra.mxu0 0.0
    %1498 = vmatprep.subr.mxu0 0.0
    %1499 = vmatpush1.msra.mxu0 0.0
    %1500 = vmatprep.subr.mxu0 0.0
    %1501 = vmatpush1.msra.mxu0 0.0
    %1502 = vmatprep.subr.mxu0 0.0
    %1503 = vmatpush1.msra.mxu0 0.0
    %1504 = vmatprep.subr.mxu0 0.0
    %1505 = vmatpush1.msra.mxu0 0.0
    %1506 = vmatprep.subr.mxu0 0.0
    %1507 = vmatpush1.msra.mxu0 0.0
    %1508 = vmatprep.subr.mxu0 0.0
    %1509 = vmatpush1.msra.mxu0 0.0
    %1510 = vmatprep.subr.mxu0 0.0
    %1511 = vmatpush1.msra.mxu0 0.0
    %1512 = vmatprep.subr.mxu0 0.0
    %1513 = vmatpush1.msra.mxu0 %v1477
    %1514 = vmatprep.subr.mxu0 0.0
    %1515 = vmatpush2.msra.mxu0 0.0
    %1516 = vmatprep.subr.mxu0 0.0
    %1517 = vmatpush2.msra.mxu0 0.0
    %1518 = vmatprep.subr.mxu0 0.0
    %1519 = vmatpush2.msra.mxu0 0.0
    %1520 = vmatprep.subr.mxu0 0.0
    %1521 = vmatpush2.msra.mxu0 0.0
    %1522 = vmatprep.subr.mxu0 0.0
    %1523 = vmatpush2.msra.mxu0 0.0
    %1524 = vmatprep.subr.mxu0 0.0
    %1525 = vmatpush2.msra.mxu0 0.0
    %1526 = vmatprep.subr.mxu0 0.0
    %1527 = vmatpush2.msra.mxu0 0.0
    %1528 = vmatprep.subr.mxu0 0.0
    %1529 = vmatpush2.msra.mxu0 0.0
    %1530 = vmatprep.subr.mxu0 0.0
    %1531 = vmatpush2.msra.mxu0 0.0
    %1532 = vmatprep.subr.mxu0 0.0
    %1533 = vmatpush2.msra.mxu0 0.0
    %1534 = vmatprep.subr.mxu0 0.0
    %1535 = vmatpush2.msra.mxu0 0.0
    %1536 = vmatprep.subr.mxu0 0.0
    %1537 = vmatpush2.msra.mxu0 0.0
    %1538 = vmatprep.subr.mxu0 0.0
    %1539 = vmatpush2.msra.mxu0 0.0
    %1540 = vmatprep.subr.mxu0 0.0
    %1541 = vmatpush2.msra.mxu0 0.0
    %1542 = vmatprep.subr.mxu0 0.0
    %1543 = vmatpush2.msra.mxu0 0.0
    %1544 = vmatprep.subr.mxu0 0.0
    %1545 = vmatpush2.msra.mxu0 0.0
    %1546 = vmatprep.mubr.f32.mxu0 0.0
    %1547 = vmatmul.mubr.f32.gmra.mxu0 %v1480
    %v1548 = vpop.f32.mrf.mxu0
    %v1549 = vadd.f32 0.0, %v1548
    %v1550 = vpop.f32.mrf.mxu0
    %1551 = vdwg.mxu0
    %v1552 = vrcp.pop %v1475
    %v1553 = vmul.f32 %v1549, %v1552
    %1555 = vrot.lane.b32.xlu0 %v1553, 24
    %v1556 = vpop.permute.xlu0 %1555
    %1558 = vst.msk [vmem:[#allocation2 + $0x8] sm:$0xff] %vm881, %v1556
    %v1559 = vld [vmem:[#allocation2] sm:$0xff]
    %v1560 = vld [vmem:[#allocation2 + $0x8] sm:$0xff]
    %v1561 = vld [vmem:[%s1] sm:$0xff]
    %v1562 = vld [vmem:[%s1 + $0x8] sm:$0xff]
    %v1563 = vld [vmem:[%s1 + $0x10] sm:$0xff]
    %v1564 = vld [vmem:[%s1 + $0x18] sm:$0xff]
    %1569 = vrot.lane.b32.xlu0 %v1561, 32
    %v1570 = vpop.permute.xlu0 %1569
    %1571 = vrot.lane.b32.xlu0 %v1562, 32
    %v1572 = vpop.permute.xlu0 %1571
    %1573 = vrot.lane.b32.xlu0 %v1563, 32
    %v1574 = vpop.permute.xlu0 %1573
    %1575 = vrot.lane.b32.xlu0 %v1564, 32
    %v1576 = vpop.permute.xlu0 %1575
    %v1582 = vsel %vm18, %v1559, 0
    %v1585 = vsel %vm18, %v1560, 0
    %1587 = vmatprep.subr.mxu0 0.0
    %1588 = vmatpush1.msra.mxu0 0.0
    %1589 = vmatprep.subr.mxu0 0.0
    %1590 = vmatpush1.msra.mxu0 0.0
    %1591 = vmatprep.subr.mxu0 0.0
    %1592 = vmatpush1.msra.mxu0 0.0
    %1593 = vmatprep.subr.mxu0 0.0
    %1594 = vmatpush1.msra.mxu0 0.0
    %1595 = vmatprep.subr.mxu0 0.0
    %1596 = vmatpush1.msra.mxu0 0.0
    %1597 = vmatprep.subr.mxu0 0.0
    %1598 = vmatpush1.msra.mxu0 0.0
    %1599 = vmatprep.subr.mxu0 0.0
    %1600 = vmatpush1.msra.mxu0 0.0
    %1601 = vmatprep.subr.mxu0 0.0
    %1602 = vmatpush1.msra.mxu0 0.0
    %1603 = vmatprep.subr.mxu0 0.0
    %1604 = vmatpush1.msra.mxu0 0.0
    %1605 = vmatprep.subr.mxu0 0.0
    %1606 = vmatpush1.msra.mxu0 0.0
    %1607 = vmatprep.subr.mxu0 0.0
    %1608 = vmatpush1.msra.mxu0 0.0
    %1609 = vmatprep.subr.mxu0 0.0
    %1610 = vmatpush1.msra.mxu0 0.0
    %1611 = vmatprep.subr.mxu0 0.0
    %1612 = vmatpush1.msra.mxu0 %v1576
    %1613 = vmatprep.subr.mxu0 0.0
    %1614 = vmatpush1.msra.mxu0 %v1574
    %1615 = vmatprep.subr.mxu0 0.0
    %1616 = vmatpush1.msra.mxu0 %v1572
    %1617 = vmatprep.subr.mxu0 0.0
    %1618 = vmatpush1.msra.mxu0 %v1570
    %1619 = vmatprep.subr.mxu0 0.0
    %1620 = vmatpush2.msra.mxu0 0.0
    %1621 = vmatprep.subr.mxu0 0.0
    %1622 = vmatpush2.msra.mxu0 0.0
    %1623 = vmatprep.subr.mxu0 0.0
    %1624 = vmatpush2.msra.mxu0 0.0
    %1625 = vmatprep.subr.mxu0 0.0
    %1626 = vmatpush2.msra.mxu0 0.0
    %1627 = vmatprep.subr.mxu0 0.0
    %1628 = vmatpush2.msra.mxu0 0.0
    %1629 = vmatprep.subr.mxu0 0.0
    %1630 = vmatpush2.msra.mxu0 0.0
    %1631 = vmatprep.subr.mxu0 0.0
    %1632 = vmatpush2.msra.mxu0 0.0
    %1633 = vmatprep.subr.mxu0 0.0
    %1634 = vmatpush2.msra.mxu0 0.0
    %1635 = vmatprep.subr.mxu0 0.0
    %1636 = vmatpush2.msra.mxu0 0.0
    %1637 = vmatprep.subr.mxu0 0.0
    %1638 = vmatpush2.msra.mxu0 0.0
    %1639 = vmatprep.subr.mxu0 0.0
    %1640 = vmatpush2.msra.mxu0 0.0
    %1641 = vmatprep.subr.mxu0 0.0
    %1642 = vmatpush2.msra.mxu0 0.0
    %1643 = vmatprep.subr.mxu0 0.0
    %1644 = vmatpush2.msra.mxu0 0.0
    %1645 = vmatprep.subr.mxu0 0.0
    %1646 = vmatpush2.msra.mxu0 0.0
    %1647 = vmatprep.subr.mxu0 0.0
    %1648 = vmatpush2.msra.mxu0 0.0
    %1649 = vmatprep.subr.mxu0 0.0
    %1650 = vmatpush2.msra.mxu0 0.0
    %1651 = vmatprep.mubr.f32.mxu0 0.0
    %1652 = vmatmul.mubr.f32.gmra.mxu0 %v1582
    %v1653 = vpop.f32.mrf.mxu0
    %v1654 = vadd.f32 0.0, %v1653
    %v1655 = vpop.f32.mrf.mxu0
    %1656 = vmatprep.mubr.f32.mxu0 0.0
    %1657 = vmatmul.mubr.f32.gmra.mxu0 %v1585
    %v1658 = vpop.f32.mrf.mxu0
    %v1659 = vadd.f32 0.0, %v1658
    %v1660 = vpop.f32.mrf.mxu0
    %1661 = vdwg.mxu0
    %1662 = vst.msk [vmem:[#allocation3] sm:$0xff] %vm18, %v1654
    %1663 = vst.msk [vmem:[#allocation3 + $0x8] sm:$0xff] %vm18, %v1659
    // Predicated region
    $region10: #{attention_block_forward.1} parent=1 // pred_check
      _
    $region11: #{attention_block_forward.1} parent=1 // pred_check_branch
      %1665 = sbr.rel (0) target = $region13
    $region12: #{attention_block_forward.1} parent=1 // pred_region
      %s1667 = ssub.s32 256, 256
      %1668 = vsyncadd [#allocation4], %s1667
      %s1669 = sshll.u32 [#allocation3], 4
      %s1670 = int_to_ptr.vmem [resolvable:$true] %s1669
      %1675 = dma.vmem_to_hbm [thread:$0]  %s1670, 256, %s2, [#allocation4], 128, 128, 8
    $region13: #{attention_block_forward.1} parent=1 // pred_fallthru
      _
    // Predicated region
    $region14: #{attention_block_forward.1} parent=1 // pred_check
      _
    $region15: #{attention_block_forward.1} parent=1 // pred_check_branch
      %1677 = sbr.rel (0) target = $region17
    $region16: #{attention_block_forward.1} parent=1 // pred_region
      %1678 = dma.done [#allocation4], 256
    $region17: #{attention_block_forward.1} parent=1 // pred_fallthru
      _
    %1679 = vsyncpa [#allocation4], 1

</llo_original>
